<compile_context>
chip_gen: v6e
topology: v6e:2x2x1
jax: 0.10.0
libtpu: 0.0.40
codegen_flags: <defaults>
</compile_context>

<pallas_src>
import functools

import jax
import jax.numpy as jnp
from jax import lax
from jax.experimental import pallas as pl
from jax.experimental.pallas import tpu as pltpu


def _attention_kernel(x_ref, wqkv_ref, wproj_t_ref, bias_ref, o_ref, *, num_heads):
    """One grid step = one batch element.  x_ref/o_ref blocks are (N, C)."""
    N, C = x_ref.shape
    hd = C // num_heads

    x = x_ref[...].astype(jnp.bfloat16)                                  # (N, C)

    # Fused QKV projection straight from the natural (tokens, C) block.
    # Contract over C of both operands (trans_b matmul) -> (3C, N), i.e.
    # channels-on-sublanes / tokens-on-lanes for the rest of the kernel.
    qkv = lax.dot_general(wqkv_ref[...], x, (((1,), (1,)), ((), ())),
                          preferred_element_type=jnp.float32)            # (3C, N)

    # Head split: sublane slices + leading-dim reshapes (tile-aligned, free).
    q = qkv[0 * C:1 * C, :].reshape(num_heads, hd, N).astype(jnp.bfloat16)
    k = qkv[1 * C:2 * C, :].reshape(num_heads, hd, N).astype(jnp.bfloat16)
    v = qkv[2 * C:3 * C, :].reshape(num_heads, hd, N).astype(jnp.bfloat16)

    # Attention scores for all heads at once: contract head_dim directly
    # (no explicit transpose; the MXU consumes the transposed-LHS operand).
    scores = lax.dot_general(q, k, (((1,), (1,)), ((0,), (0,))),
                             preferred_element_type=jnp.float32)         # (H, N, N)

    # Numerically stable softmax over keys (f32); divide on the EUP.
    m = jnp.max(scores, axis=-1, keepdims=True)
    p = jnp.exp(scores - m)
    denom = jnp.sum(p, axis=-1, keepdims=True)
    attn = (p * pl.reciprocal(denom, approx=True)).astype(jnp.bfloat16)  # (H, N, N)

    # Per-head context in transposed layout: ctx[h,d,i] = sum_j v[h,d,j]*attn[h,i,j]
    ctx = lax.dot_general(v, attn, (((2,), (2,)), ((0,), (0,))),
                          preferred_element_type=jnp.float32)            # (H, hd, N)
    ctx = ctx.astype(jnp.bfloat16).reshape(C, N)                         # free merge

    # Output projection emitted directly in (tokens, C) layout:
    # contract C_in (dim 0 of ctx, dim 0 of the pre-transposed weight).
    y = lax.dot_general(ctx, wproj_t_ref[...], (((0,), (0,)), ((), ())),
                        preferred_element_type=jnp.float32)              # (N, C)
    y = y + bias_ref[...]                                                # (1, C) bcast
    o_ref[...] = y.astype(o_ref.dtype)


def volo_attention(x, qkv_weight, proj_weight, proj_bias, num_heads):
    """x: (B, H, W, C) float32.
    qkv_weight: (3C, C), proj_weight: (C, C)  -- PyTorch nn.Linear (out, in) layout.
    proj_bias: (C,).
    """
    B, Hs, Ws, C = x.shape
    N = Hs * Ws
    assert C % num_heads == 0
    hd = C // num_heads
    scale = hd ** (-0.5)

    # ---- one-time weight prep ----------------------------------------------
    # Fold the softmax scale into the Q rows; keep (out, in) orientation for the
    # QKV matmul; pre-transpose the proj weight to (C_in, C_out) so the final
    # matmul is a plain trans_a dot; bf16 operands for the MXU.
    wqkv = qkv_weight.at[:C, :].multiply(scale).astype(jnp.bfloat16)      # (3C, C)
    wproj_t = proj_weight.T.astype(jnp.bfloat16)                          # (C, C)
    bias = proj_bias.reshape(1, C).astype(jnp.float32)                    # (1, C)

    # Natural layout: (B, N, C) is a free reshape of (B, H, W, C) -> no extra
    # HBM transpose passes on either the input or the output.
    x_r = x.reshape(B, N, C)

    kernel = functools.partial(_attention_kernel, num_heads=num_heads)

    # VMEM budget: (H, N, N) f32 softmax temporaries + double-buffered (N, C)
    # I/O blocks + weight buffers; clamp to stay within v7x's 64 MiB/TC.
    est = (3 * num_heads * N * N * 4          # scores / p / attn temporaries
           + 2 * 2 * N * C * 4                # double-buffered x / out blocks
           + 2 * (4 * C * C + C) * 2)         # wqkv + wproj + bias (bf16, 2 bufs)
    vmem_limit = int(min(64 * 1024 * 1024, max(32 * 1024 * 1024, 2 * est)))

    out = pl.pallas_call(
        kernel,
        out_shape=jax.ShapeDtypeStruct((B, N, C), x.dtype),
        grid_spec=pltpu.PrefetchScalarGridSpec(
            num_scalar_prefetch=0,
            grid=(B,),                                      # per-batch blocking
            in_specs=[
                pl.BlockSpec((None, N, C), lambda b: (b, 0, 0)),   # x block (N, C)
                pl.BlockSpec((3 * C, C), lambda b: (0, 0)),        # qkv weight
                pl.BlockSpec((C, C), lambda b: (0, 0)),            # proj weight^T
                pl.BlockSpec((1, C), lambda b: (0, 0)),            # proj bias
            ],
            out_specs=pl.BlockSpec((None, N, C), lambda b: (b, 0, 0)),
        ),
        compiler_params=pltpu.CompilerParams(
            dimension_semantics=("parallel",),              # even B splits v7x's 2 TCs
            vmem_limit_bytes=vmem_limit),
    )(x_r, wqkv, wproj_t, bias)

    return out.reshape(B, Hs, Ws, C)


def _reference_attention(x, qkv_weight, proj_weight, proj_bias, num_heads):
    """Pure-JAX f32 reference mirroring the PyTorch forward exactly."""
    B, Hs, Ws, C = x.shape
    N = Hs * Ws
    hd = C // num_heads
    scale = hd ** (-0.5)
    xf = x.reshape(B, N, C)
    qkv = xf @ qkv_weight.T                                             # (B, N, 3C)
    qkv = qkv.reshape(B, N, 3, num_heads, hd).transpose(2, 0, 3, 1, 4)  # (3,B,h,N,d)
    q, k, v = qkv[0], qkv[1], qkv[2]
    attn = jax.nn.softmax((q * scale) @ jnp.swapaxes(k, -2, -1), axis=-1)
    ctx = (attn @ v).transpose(0, 2, 1, 3).reshape(B, N, C)
    y = ctx @ proj_weight.T + proj_bias
    return y.reshape(B, Hs, Ws, C)


if __name__ == "__main__":
    # Small shapes consistent with the module's forward (B, H, W, C), num_heads=8.
    B, Hs, Ws, C = 4, 8, 8, 128
    num_heads = 8

    key = jax.random.PRNGKey(0)
    k_x, k_qkv, k_proj, k_bias = jax.random.split(key, 4)

    x = jax.random.normal(k_x, (B, Hs, Ws, C), dtype=jnp.float32)
    # nn.Linear weights in their native (out, in) orientation.
    qkv_w = 0.05 * jax.random.normal(k_qkv, (3 * C, C), dtype=jnp.float32)
    proj_w = 0.05 * jax.random.normal(k_proj, (C, C), dtype=jnp.float32)
    proj_b = 0.05 * jax.random.normal(k_bias, (C,), dtype=jnp.float32)

    y = volo_attention(x, qkv_w, proj_w, proj_b, num_heads)
    y = jax.block_until_ready(y)

    y_ref = _reference_attention(x, qkv_w, proj_w, proj_b, num_heads)
    assert y.shape == (B, Hs, Ws, C)
    # bf16 MXU operands + approximate reciprocal -> looser tolerance than pure f32.
    max_err = jnp.max(jnp.abs(y - y_ref))
    assert jnp.allclose(y, y_ref, atol=2e-2, rtol=2e-2), (
        f"mismatch vs reference, max abs err = {max_err}")

    # TODO(synk): attn_drop / proj_drop are identity (eval mode); training-time
    # dropout is not implemented in the kernel.
    print("KERNEL_OK")
</pallas_src>

<mosaic_0001>
module attributes {stable_mosaic.version = 11 : i64} {
  func.func @_attention_kernel(%arg0: i32, %arg1: memref<1x64x128xf32, #tpu.memory_space<vmem>>, %arg2: memref<384x128xbf16, #tpu.memory_space<vmem>>, %arg3: memref<128x128xbf16, #tpu.memory_space<vmem>>, %arg4: memref<1x128xf32, #tpu.memory_space<vmem>>, %arg5: memref<1x64x128xf32, #tpu.memory_space<vmem>>) attributes {dimension_semantics = [#tpu.dimension_semantics<parallel>], iteration_bounds = array<i64: 4>, scalar_prefetch = 0 : i64, scratch_operands = 0 : i64, tpu.core_type = #tpu.core_type<tc>, window_params = [{transform_indices = @transform_0, window_bounds = array<i64: 1, 64, 128>}, {pipeline_mode = #tpu.pipeline_mode<synchronous>, transform_indices = @transform_1, window_bounds = array<i64: 384, 128>}, {pipeline_mode = #tpu.pipeline_mode<synchronous>, transform_indices = @transform_2, window_bounds = array<i64: 128, 128>}, {pipeline_mode = #tpu.pipeline_mode<synchronous>, transform_indices = @transform_3, window_bounds = array<i64: 1, 128>}, {transform_indices = @transform_4, window_bounds = array<i64: 1, 64, 128>}]} {
    %c0 = arith.constant 0 : index
    %c0_0 = arith.constant 0 : index
    %c0_1 = arith.constant 0 : index
    %0 = vector.load %arg1[%c0, %c0_0, %c0_1] : memref<1x64x128xf32, #tpu.memory_space<vmem>>, vector<1x64x128xf32>
    %1 = vector.shape_cast %0 : vector<1x64x128xf32> to vector<64x128xf32>
    %2 = arith.truncf %1 : vector<64x128xf32> to vector<64x128xbf16>
    %c0_2 = arith.constant 0 : index
    %c0_3 = arith.constant 0 : index
    %3 = vector.load %arg2[%c0_2, %c0_3] : memref<384x128xbf16, #tpu.memory_space<vmem>>, vector<384x128xbf16>
    %cst = arith.constant dense<0.000000e+00> : vector<384x64xf32>
    %4 = tpu.matmul %3, %2, %cst {dimension_numbers = #tpu.dot_dimension_numbers<[1], [1], [0], [0], [0, 0, 1, 0], [], []>} : vector<384x128xbf16>, vector<64x128xbf16>, vector<384x64xf32> -> vector<384x64xf32>
    %5 = vector.extract_strided_slice %4 {offsets = [0, 0], sizes = [128, 64], strides = [1, 1]} : vector<384x64xf32> to vector<128x64xf32>
    %6 = vector.shape_cast %5 : vector<128x64xf32> to vector<8x16x64xf32>
    %7 = arith.truncf %6 : vector<8x16x64xf32> to vector<8x16x64xbf16>
    %8 = vector.extract_strided_slice %4 {offsets = [128, 0], sizes = [128, 64], strides = [1, 1]} : vector<384x64xf32> to vector<128x64xf32>
    %9 = vector.shape_cast %8 : vector<128x64xf32> to vector<8x16x64xf32>
    %10 = arith.truncf %9 : vector<8x16x64xf32> to vector<8x16x64xbf16>
    %11 = vector.extract_strided_slice %4 {offsets = [256, 0], sizes = [128, 64], strides = [1, 1]} : vector<384x64xf32> to vector<128x64xf32>
    %12 = vector.shape_cast %11 : vector<128x64xf32> to vector<8x16x64xf32>
    %13 = arith.truncf %12 : vector<8x16x64xf32> to vector<8x16x64xbf16>
    %cst_4 = arith.constant dense<0.000000e+00> : vector<8x64x64xf32>
    %14 = tpu.matmul %7, %10, %cst_4 {dimension_numbers = #tpu.dot_dimension_numbers<[1], [1], [2], [2], [0, 0, 0, 2, 1, 2], [0], [0]>} : vector<8x16x64xbf16>, vector<8x16x64xbf16>, vector<8x64x64xf32> -> vector<8x64x64xf32>
    %cst_5 = arith.constant dense<0xFF800000> : vector<8x64xf32>
    %15 = vector.multi_reduction <maximumf>, %14, %cst_5 [2] : vector<8x64x64xf32> to vector<8x64xf32>
    %16 = vector.shape_cast %15 : vector<8x64xf32> to vector<8x64x1xf32>
    %17 = vector.broadcast %16 : vector<8x64x1xf32> to vector<8x64x64xf32>
    %18 = arith.subf %14, %17 : vector<8x64x64xf32>
    %19 = math.exp %18 : vector<8x64x64xf32>
    %cst_6 = arith.constant dense<0.000000e+00> : vector<8x64xf32>
    %20 = vector.multi_reduction <add>, %19, %cst_6 [2] : vector<8x64x64xf32> to vector<8x64xf32>
    %21 = vector.shape_cast %20 : vector<8x64xf32> to vector<8x64x1xf32>
    %22 = tpu.reciprocal %21 {approx = true} : vector<8x64x1xf32> -> vector<8x64x1xf32>
    %23 = vector.broadcast %22 : vector<8x64x1xf32> to vector<8x64x64xf32>
    %24 = arith.mulf %19, %23 : vector<8x64x64xf32>
    %25 = arith.truncf %24 : vector<8x64x64xf32> to vector<8x64x64xbf16>
    %cst_7 = arith.constant dense<0.000000e+00> : vector<8x16x64xf32>
    %26 = tpu.matmul %13, %25, %cst_7 {dimension_numbers = #tpu.dot_dimension_numbers<[2], [2], [1], [1], [0, 0, 0, 1, 1, 1], [0], [0]>} : vector<8x16x64xbf16>, vector<8x64x64xbf16>, vector<8x16x64xf32> -> vector<8x16x64xf32>
    %27 = arith.truncf %26 : vector<8x16x64xf32> to vector<8x16x64xbf16>
    %28 = vector.shape_cast %27 : vector<8x16x64xbf16> to vector<128x64xbf16>
    %c0_8 = arith.constant 0 : index
    %c0_9 = arith.constant 0 : index
    %29 = vector.load %arg3[%c0_8, %c0_9] : memref<128x128xbf16, #tpu.memory_space<vmem>>, vector<128x128xbf16>
    %cst_10 = arith.constant dense<0.000000e+00> : vector<64x128xf32>
    %30 = tpu.matmul %28, %29, %cst_10 {dimension_numbers = #tpu.dot_dimension_numbers<[0], [0], [1], [1], [0, 1, 1, 1], [], []>} : vector<128x64xbf16>, vector<128x128xbf16>, vector<64x128xf32> -> vector<64x128xf32>
    %c0_11 = arith.constant 0 : index
    %c0_12 = arith.constant 0 : index
    %31 = vector.load %arg4[%c0_11, %c0_12] : memref<1x128xf32, #tpu.memory_space<vmem>>, vector<1x128xf32>
    %32 = vector.broadcast %31 : vector<1x128xf32> to vector<64x128xf32>
    %33 = arith.addf %30, %32 : vector<64x128xf32>
    %c0_13 = arith.constant 0 : index
    %c0_14 = arith.constant 0 : index
    %c0_15 = arith.constant 0 : index
    %34 = vector.load %arg5[%c0_13, %c0_14, %c0_15] : memref<1x64x128xf32, #tpu.memory_space<vmem>>, vector<1x64x128xf32>
    %35 = vector.shape_cast %34 : vector<1x64x128xf32> to vector<64x128xf32>
    %36 = vector.shape_cast %33 : vector<64x128xf32> to vector<1x64x128xf32>
    tpu.vector_store %arg5[%c0_13, %c0_14, %c0_15], %36 {strides = array<i32>} : memref<1x64x128xf32, #tpu.memory_space<vmem>>, vector<1x64x128xf32>,
    return
  }
  func.func @transform_0(%arg0: i32) -> (i32, i32, i32) {
    %c0_i32 = arith.constant 0 : i32
    %c0_i32_0 = arith.constant 0 : i32
    %c0_i32_1 = arith.constant 0 : i32
    return %arg0, %c0_i32, %c0_i32_0 : i32, i32, i32
  }
  func.func @transform_1(%arg0: i32) -> (i32, i32) {
    %c0_i32 = arith.constant 0 : i32
    %c0_i32_0 = arith.constant 0 : i32
    %c0_i32_1 = arith.constant 0 : i32
    return %c0_i32, %c0_i32_0 : i32, i32
  }
  func.func @transform_2(%arg0: i32) -> (i32, i32) {
    %c0_i32 = arith.constant 0 : i32
    %c0_i32_0 = arith.constant 0 : i32
    %c0_i32_1 = arith.constant 0 : i32
    return %c0_i32, %c0_i32_0 : i32, i32
  }
  func.func @transform_3(%arg0: i32) -> (i32, i32) {
    %c0_i32 = arith.constant 0 : i32
    %c0_i32_0 = arith.constant 0 : i32
    %c0_i32_1 = arith.constant 0 : i32
    return %c0_i32, %c0_i32_0 : i32, i32
  }
  func.func @transform_4(%arg0: i32) -> (i32, i32, i32) {
    %c0_i32 = arith.constant 0 : i32
    %c0_i32_0 = arith.constant 0 : i32
    %c0_i32_1 = arith.constant 0 : i32
    return %arg0, %c0_i32, %c0_i32_0 : i32, i32, i32
  }
}

</mosaic_0001>

<llo_original>
// kernel: tpu_custom_call.1
$region0: #{tpu_custom_call.1}
  #allocation0 [shape = 'u32[]', space=smem, size = 0x4, offset = 0x4, fixed_abs, tag = 'smem constant byte address 0x4 - core index']
  #allocation1 [shape = 'u32[144,128]{1,0:T(1,128)}', space=vmem, size = 0x12000, scoped, tag = 'internal scratch']
  %s0 = inlined_call_operand.hbm [shape: f32[4,64,128], index: 0, kind: input, shape index: {}]
  %s1 = inlined_call_operand.hbm [shape: bf16[384,128], index: 1, kind: input, shape index: {}]
  %s2 = inlined_call_operand.hbm [shape: bf16[128,128], index: 2, kind: input, shape index: {}]
  %s3 = inlined_call_operand.vmem [shape: f32[1,128], index: 3, kind: input, shape index: {}]
  %s4 = inlined_call_operand.hbm [shape: f32[4,64,128], index: 4, kind: output, shape index: {}]
  %s5 = sld [smem:[#allocation0]]
  $region61: #{tpu_custom_call.1} parent=0
    _
  %s7 = ssub.s32 1, %s5
  %s8 = scalar_select 0, %s7, %s5
  $region1: #{tpu_custom_call.1} parent=0
    #allocation2 [shape = 'u8[65536]{0}', space=vmem, size = 0x10000, scoped, tag = 'input window, operand 0']
    #allocation3 [shape = 's32[2]{0}', space=sflag, size = 0x8, scoped, tag = 'scoped memory for tpu_custom_call.1']
    #allocation4 [shape = 's32[2]{0}', space=sflag, size = 0x8, scoped, tag = 'scoped memory for tpu_custom_call.1']
    #allocation5 [shape = 'u8[98304]{0}', space=vmem, size = 0x18000, scoped, tag = 'input window, operand 1, single buffered']
    #allocation6 [shape = 's32[1]{0}', space=sflag, size = 0x4, scoped, tag = 'scoped memory for tpu_custom_call.1']
    #allocation7 [shape = 'u8[32768]{0}', space=vmem, size = 0x8000, scoped, tag = 'input window, operand 2, single buffered']
    #allocation8 [shape = 'u8[65536]{0}', space=vmem, size = 0x10000, scoped, tag = 'output window, operand 0']
    %9 = vsyncpa [#allocation3], 0
    %s10 = scalar_lea.sflag [#allocation3], 1
    %11 = vsyncpa %s10, 0
    %12 = vsyncpa [#allocation6], 0
    %13 = vsyncpa [#allocation4], 0
    %s14 = scalar_lea.sflag [#allocation4], 1
    %15 = vsyncpa %s14, 0
    loop: start=0, step=1, limit=6
    $region2: #{tpu_custom_call.1} parent=1 // loop_pre_header
      _
    $region3: #{tpu_custom_call.1} parent=1 // loop_header
      %s17 = sphi 0, %s21
      %p18 = scmp.ge.s32.totalorder %s17, 6
      %s27 = sphi 0, %s29
      %s30 = sphi 0, %s27
      %s31 = sphi 0, %s30
      %s47 = sphi 0, %s31
      %s51 = sphi 0, %s51
      %s53 = sphi 0, %s51
      %s54 = sphi 0, %s53
      %s68 = sphi 0, %s54
      %s72 = sphi 0, %s72
      %s74 = sphi 0, %s72
      %s75 = sphi 0, %s74
      %s89 = sphi 0, %s75
      %s93 = sphi 0, %s93
      %s95 = sphi 0, %s93
      %s96 = sphi 0, %s95
      %s110 = sphi 0, %s96
      %s116 = sphi 0, %s118
      %s119 = sphi 0, %s116
      %s120 = sphi 0, %s119
      %s136 = sphi 0, %s120
    $region4: #{tpu_custom_call.1} parent=1 // loop_header_branch
      %20 = sbr.rel (%p18) target = $region8
    $region5: #{tpu_custom_call.1} parent=1 // loop_body
      %s22 = ssub.s32 %s17, 1
      %s23 = ssub.s32 %s17, 2
      %s24 = sadd.s32 %s17, 1
      %s25 = ssub.s32 %s17, %s24
      %p26 = scmp.eq.s32.totalorder %s25, 0
      %s28 = sadd.s32 %s27, 1
      %s29 = scalar_select %p26, %s27, %s28
      %p32 = pneg %p26
      %p33 = scmp.eq.s32.totalorder %s17, 3
      %p34 = por %p32, %p33
      %p35 = scmp.ne.s32.totalorder %s27, %s30
      %p36 = scmp.eq.s32.totalorder %s17, 0
      %p37 = por %p35, %p36
      %p38 = scmp.ne.s32.totalorder %s27, %s30
      %p39 = scmp.eq.s32.totalorder %s22, 3
      %p40 = por %p38, %p39
      %p41 = scmp.ne.s32.totalorder %s30, %s31
      %p42 = scmp.eq.s32.totalorder %s22, 0
      %p43 = por %p41, %p42
      %p44 = scmp.ne.s32.totalorder %s30, %s31
      %p45 = scmp.eq.s32.totalorder %s23, 3
      %p46 = por %p44, %p45
      %p48 = scmp.ne.s32.totalorder %s31, %s47
      %p49 = scmp.eq.s32.totalorder %s23, 0
      %p50 = por %p48, %p49
      %s52 = sadd.s32 %s51, 1
      %p55 = scmp.eq.s32.totalorder %s17, 3
      %p56 = scmp.ne.s32.totalorder %s51, %s53
      %p57 = scmp.eq.s32.totalorder %s17, 0
      %p58 = por %p56, %p57
      %p59 = scmp.ne.s32.totalorder %s51, %s53
      %p60 = scmp.eq.s32.totalorder %s22, 3
      %p61 = por %p59, %p60
      %p62 = scmp.ne.s32.totalorder %s53, %s54
      %p63 = scmp.eq.s32.totalorder %s22, 0
      %p64 = por %p62, %p63
      %p65 = scmp.ne.s32.totalorder %s53, %s54
      %p66 = scmp.eq.s32.totalorder %s23, 3
      %p67 = por %p65, %p66
      %p69 = scmp.ne.s32.totalorder %s54, %s68
      %p70 = scmp.eq.s32.totalorder %s23, 0
      %p71 = por %p69, %p70
      %s73 = sadd.s32 %s72, 1
      %p76 = scmp.eq.s32.totalorder %s17, 3
      %p77 = scmp.ne.s32.totalorder %s72, %s74
      %p78 = scmp.eq.s32.totalorder %s17, 0
      %p79 = por %p77, %p78
      %p80 = scmp.ne.s32.totalorder %s72, %s74
      %p81 = scmp.eq.s32.totalorder %s22, 3
      %p82 = por %p80, %p81
      %p83 = scmp.ne.s32.totalorder %s74, %s75
      %p84 = scmp.eq.s32.totalorder %s22, 0
      %p85 = por %p83, %p84
      %p86 = scmp.ne.s32.totalorder %s74, %s75
      %p87 = scmp.eq.s32.totalorder %s23, 3
      %p88 = por %p86, %p87
      %p90 = scmp.ne.s32.totalorder %s75, %s89
      %p91 = scmp.eq.s32.totalorder %s23, 0
      %p92 = por %p90, %p91
      %s94 = sadd.s32 %s93, 1
      %p97 = scmp.eq.s32.totalorder %s17, 3
      %p98 = scmp.ne.s32.totalorder %s93, %s95
      %p99 = scmp.eq.s32.totalorder %s17, 0
      %p100 = por %p98, %p99
      %p101 = scmp.ne.s32.totalorder %s93, %s95
      %p102 = scmp.eq.s32.totalorder %s22, 3
      %p103 = por %p101, %p102
      %p104 = scmp.ne.s32.totalorder %s95, %s96
      %p105 = scmp.eq.s32.totalorder %s22, 0
      %p106 = por %p104, %p105
      %p107 = scmp.ne.s32.totalorder %s95, %s96
      %p108 = scmp.eq.s32.totalorder %s23, 3
      %p109 = por %p107, %p108
      %p111 = scmp.ne.s32.totalorder %s96, %s110
      %p112 = scmp.eq.s32.totalorder %s23, 0
      %p113 = por %p111, %p112
      %s114 = ssub.s32 %s17, %s24
      %p115 = scmp.eq.s32.totalorder %s114, 0
      %s117 = sadd.s32 %s116, 1
      %s118 = scalar_select %p115, %s116, %s117
      %p121 = pneg %p115
      %p122 = scmp.eq.s32.totalorder %s17, 3
      %p123 = por %p121, %p122
      %p124 = scmp.ne.s32.totalorder %s116, %s119
      %p125 = scmp.eq.s32.totalorder %s17, 0
      %p126 = por %p124, %p125
      %p127 = scmp.ne.s32.totalorder %s116, %s119
      %p128 = scmp.eq.s32.totalorder %s22, 3
      %p129 = por %p127, %p128
      %p130 = scmp.ne.s32.totalorder %s119, %s120
      %p131 = scmp.eq.s32.totalorder %s22, 0
      %p132 = por %p130, %p131
      %p133 = scmp.ne.s32.totalorder %s119, %s120
      %p134 = scmp.eq.s32.totalorder %s23, 3
      %p135 = por %p133, %p134
      %p137 = scmp.ne.s32.totalorder %s120, %s136
      %p138 = scmp.eq.s32.totalorder %s23, 0
      %p139 = por %p137, %p138
      %p140 = scmp.le.s32.totalorder 1, %s17
      %p141 = scmp.lt.s32.totalorder %s17, 5
      %p142 = pnand %p140, %p141
      %p143 = pneg %p142
      // Predicated region
      $region9: #{tpu_custom_call.1} parent=5 // pred_check
        _
      $region10: #{tpu_custom_call.1} parent=5 // pred_check_branch
        %145 = sbr.rel (%p142) target = $region12
      $region11: #{tpu_custom_call.1} parent=5 // pred_region
        %s146 = ssub.s32 %s17, 1
        // Predicated region
        $region13: #{tpu_custom_call.1} parent=11 // pred_check
          %p147 = pneg %p64
        $region14: #{tpu_custom_call.1} parent=11 // pred_check_branch
          %149 = sbr.rel (%p147) target = $region16
        $region15: #{tpu_custom_call.1} parent=11 // pred_region
          %s151 = ssub.s32 3072, 3072
          %152 = vsyncadd [#allocation6], %s151
          %s153 = sshll.u32 [#allocation5], 4
          %s154 = int_to_ptr.vmem [resolvable:$true] %s153
          %159 = dma.hbm_to_vmem [thread:$0]  %s1, 3072, %s154, [#allocation6], 64, 64, 4
        $region16: #{tpu_custom_call.1} parent=11 // pred_fallthru
          _
        // Predicated region
        $region17: #{tpu_custom_call.1} parent=11 // pred_check
          %p160 = pneg %p85
        $region18: #{tpu_custom_call.1} parent=11 // pred_check_branch
          %162 = sbr.rel (%p160) target = $region20
        $region19: #{tpu_custom_call.1} parent=11 // pred_region
          %s164 = ssub.s32 1024, 1024
          %165 = vsyncadd [#allocation6], %s164
          %s166 = sshll.u32 [#allocation7], 4
          %s167 = int_to_ptr.vmem [resolvable:$true] %s166
          %172 = dma.hbm_to_vmem [thread:$0]  %s2, 1024, %s167, [#allocation6], 64, 64, 4
        $region20: #{tpu_custom_call.1} parent=11 // pred_fallthru
          _
        // Predicated region
        $region21: #{tpu_custom_call.1} parent=11 // pred_check
          %p173 = pneg %p106
        $region22: #{tpu_custom_call.1} parent=11 // pred_check_branch
          %175 = sbr.rel (%p173) target = $region24
        $region23: #{tpu_custom_call.1} parent=11 // pred_region
          _
        $region24: #{tpu_custom_call.1} parent=11 // pred_fallthru
          _
      $region12: #{tpu_custom_call.1} parent=5 // pred_fallthru
        _
      %p176 = scmp.lt.s32.totalorder %s17, 4
      // Predicated region
      $region25: #{tpu_custom_call.1} parent=5 // pred_check
        %p177 = pneg %p176
      $region26: #{tpu_custom_call.1} parent=5 // pred_check_branch
        %179 = sbr.rel (%p177) target = $region28
      $region27: #{tpu_custom_call.1} parent=5 // pred_region
        // Predicated region
        $region29: #{tpu_custom_call.1} parent=27 // pred_check
          %p180 = pneg %p37
        $region30: #{tpu_custom_call.1} parent=27 // pred_check_branch
          %182 = sbr.rel (%p180) target = $region32
        $region31: #{tpu_custom_call.1} parent=27 // pred_region
          %s183 = sand.u32 %s27, 1
          %s184 = scalar_lea.sflag [#allocation3], %s183
          %s185 = sand.u32 %s27, 1
          %s186 = smul.addr %s185, 64
          %s187 = scalar_lea.vmem [#allocation2], %s186
          %s189 = ssub.s32 1024, 1024
          %190 = vsyncadd %s184, %s189
          %s191 = smul.addr %s17, 8
          %s192 = smul.addr %s191, 128
          %s193 = scalar_lea.hbm %s0, %s192
          %s194 = sshll.u32 %s187, 4
          %s195 = int_to_ptr.vmem [resolvable:$true] %s194
          %200 = dma.hbm_to_vmem [thread:$0]  %s193, 1024, %s195, %s184, 128, 128, 8
        $region32: #{tpu_custom_call.1} parent=27 // pred_fallthru
          _
      $region28: #{tpu_custom_call.1} parent=5 // pred_fallthru
        _
      %p201 = scmp.le.s32.totalorder 1, %s17
      %p202 = scmp.lt.s32.totalorder %s17, 5
      %p203 = pnand %p201, %p202
      %p204 = pneg %p203
      // Predicated region
      $region33: #{tpu_custom_call.1} parent=5 // pred_check
        _
      $region34: #{tpu_custom_call.1} parent=5 // pred_check_branch
        %206 = sbr.rel (%p203) target = $region36
      $region35: #{tpu_custom_call.1} parent=5 // pred_region
        %s207 = ssub.s32 %s17, 1
        %s208 = sand.u32 %s30, 1
        %s209 = scalar_lea.sflag [#allocation3], %s208
        %s210 = sand.u32 %s30, 1
        %s211 = smul.addr %s210, 64
        %s212 = scalar_lea.vmem [#allocation2], %s211
        // Predicated region
        $region37: #{tpu_custom_call.1} parent=35 // pred_check
          %p213 = pneg %p43
        $region38: #{tpu_custom_call.1} parent=35 // pred_check_branch
          %215 = sbr.rel (%p213) target = $region40
        $region39: #{tpu_custom_call.1} parent=35 // pred_region
          %216 = dma.done %s209, 1024
        $region40: #{tpu_custom_call.1} parent=35 // pred_fallthru
          _
        // Predicated region
        $region41: #{tpu_custom_call.1} parent=35 // pred_check
          %p217 = pneg %p64
        $region42: #{tpu_custom_call.1} parent=35 // pred_check_branch
          %219 = sbr.rel (%p217) target = $region44
        $region43: #{tpu_custom_call.1} parent=35 // pred_region
          %220 = dma.done [#allocation6], 3072
        $region44: #{tpu_custom_call.1} parent=35 // pred_fallthru
          _
        // Predicated region
        $region45: #{tpu_custom_call.1} parent=35 // pred_check
          %p221 = pneg %p85
        $region46: #{tpu_custom_call.1} parent=35 // pred_check_branch
          %223 = sbr.rel (%p221) target = $region48
        $region47: #{tpu_custom_call.1} parent=35 // pred_region
          %224 = dma.done [#allocation6], 1024
        $region48: #{tpu_custom_call.1} parent=35 // pred_fallthru
          _
        %s225 = sand.u32 %s30, 1
        %s226 = scalar_lea.sflag [#allocation3], %s225
        %s227 = sand.u32 %s30, 1
        %s228 = smul.addr %s227, 64
        %s229 = scalar_lea.vmem [#allocation2], %s228
        %p230 = pneg %p43
        %p231 = pneg %p40
        %p232 = pneg %p64
        %p233 = pneg %p61
        %p234 = pneg %p85
        %p235 = pneg %p82
        %p236 = pneg %p106
        %p237 = pneg %p103
        %p238 = pneg %p132
        %p239 = pneg %p129
        %s240 = sand.u32 %s119, 1
        %s241 = scalar_lea.sflag [#allocation4], %s240
        %s242 = sand.u32 %s119, 1
        %s243 = smul.addr %s242, 64
        %s244 = scalar_lea.vmem [#allocation8], %s243
        %v246 = vld [vmem:[%s212] sm:$0xff]
        %v247 = vld [vmem:[%s212 + $0x8] sm:$0xff]
        %v248 = vld [vmem:[%s212 + $0x10] sm:$0xff]
        %v249 = vld [vmem:[%s212 + $0x18] sm:$0xff]
        %v250 = vld [vmem:[%s212 + $0x20] sm:$0xff]
        %v251 = vld [vmem:[%s212 + $0x28] sm:$0xff]
        %v252 = vld [vmem:[%s212 + $0x30] sm:$0xff]
        %v253 = vld [vmem:[%s212 + $0x38] sm:$0xff]
        %v254 = vpack.c.bf16 %v247, %v246
        %v255 = vpack.c.bf16 %v249, %v248
        %v256 = vpack.c.bf16 %v251, %v250
        %v257 = vpack.c.bf16 %v253, %v252
        %v258 = vld [vmem:[#allocation5] sm:$0xf]
        %v259 = vld [vmem:[#allocation5 + $0x4] sm:$0xf]
        %v260 = vld [vmem:[#allocation5 + $0x8] sm:$0xf]
        %v261 = vld [vmem:[#allocation5 + $0xc] sm:$0xf]
        %v262 = vld [vmem:[#allocation5 + $0x10] sm:$0xf]
        %v263 = vld [vmem:[#allocation5 + $0x14] sm:$0xf]
        %v264 = vld [vmem:[#allocation5 + $0x18] sm:$0xf]
        %v265 = vld [vmem:[#allocation5 + $0x1c] sm:$0xf]
        %v266 = vld [vmem:[#allocation5 + $0x20] sm:$0xf]
        %v267 = vld [vmem:[#allocation5 + $0x24] sm:$0xf]
        %v268 = vld [vmem:[#allocation5 + $0x28] sm:$0xf]
        %v269 = vld [vmem:[#allocation5 + $0x2c] sm:$0xf]
        %v270 = vld [vmem:[#allocation5 + $0x30] sm:$0xf]
        %v271 = vld [vmem:[#allocation5 + $0x34] sm:$0xf]
        %v272 = vld [vmem:[#allocation5 + $0x38] sm:$0xf]
        %v273 = vld [vmem:[#allocation5 + $0x3c] sm:$0xf]
        %v274 = vld [vmem:[#allocation5 + $0x40] sm:$0xf]
        %v275 = vld [vmem:[#allocation5 + $0x44] sm:$0xf]
        %v276 = vld [vmem:[#allocation5 + $0x48] sm:$0xf]
        %v277 = vld [vmem:[#allocation5 + $0x4c] sm:$0xf]
        %v278 = vld [vmem:[#allocation5 + $0x50] sm:$0xf]
        %v279 = vld [vmem:[#allocation5 + $0x54] sm:$0xf]
        %v280 = vld [vmem:[#allocation5 + $0x58] sm:$0xf]
        %v281 = vld [vmem:[#allocation5 + $0x5c] sm:$0xf]
        %v282 = vld [vmem:[#allocation5 + $0x60] sm:$0xf]
        %v283 = vld [vmem:[#allocation5 + $0x64] sm:$0xf]
        %v284 = vld [vmem:[#allocation5 + $0x68] sm:$0xf]
        %v285 = vld [vmem:[#allocation5 + $0x6c] sm:$0xf]
        %v286 = vld [vmem:[#allocation5 + $0x70] sm:$0xf]
        %v287 = vld [vmem:[#allocation5 + $0x74] sm:$0xf]
        %v288 = vld [vmem:[#allocation5 + $0x78] sm:$0xf]
        %v289 = vld [vmem:[#allocation5 + $0x7c] sm:$0xf]
        %v290 = vld [vmem:[#allocation5 + $0x80] sm:$0xf]
        %v291 = vld [vmem:[#allocation5 + $0x84] sm:$0xf]
        %v292 = vld [vmem:[#allocation5 + $0x88] sm:$0xf]
        %v293 = vld [vmem:[#allocation5 + $0x8c] sm:$0xf]
        %v294 = vld [vmem:[#allocation5 + $0x90] sm:$0xf]
        %v295 = vld [vmem:[#allocation5 + $0x94] sm:$0xf]
        %v296 = vld [vmem:[#allocation5 + $0x98] sm:$0xf]
        %v297 = vld [vmem:[#allocation5 + $0x9c] sm:$0xf]
        %v298 = vld [vmem:[#allocation5 + $0xa0] sm:$0xf]
        %v299 = vld [vmem:[#allocation5 + $0xa4] sm:$0xf]
        %v300 = vld [vmem:[#allocation5 + $0xa8] sm:$0xf]
        %v301 = vld [vmem:[#allocation5 + $0xac] sm:$0xf]
        %v302 = vld [vmem:[#allocation5 + $0xb0] sm:$0xf]
        %v303 = vld [vmem:[#allocation5 + $0xb4] sm:$0xf]
        %v304 = vld [vmem:[#allocation5 + $0xb8] sm:$0xf]
        %v305 = vld [vmem:[#allocation5 + $0xbc] sm:$0xf]
        %v354 = vunpack.c.l.b16 %v258
        %v355 = vunpack.c.l.b16 %v259
        %v356 = vunpack.c.l.b16 %v260
        %v357 = vunpack.c.l.b16 %v261
        %v358 = vunpack.c.l.b16 %v262
        %v359 = vunpack.c.l.b16 %v263
        %v360 = vunpack.c.l.b16 %v264
        %v361 = vunpack.c.l.b16 %v265
        %v362 = vunpack.c.l.b16 %v266
        %v363 = vunpack.c.l.b16 %v267
        %v364 = vunpack.c.l.b16 %v268
        %v365 = vunpack.c.l.b16 %v269
        %v366 = vunpack.c.l.b16 %v270
        %v367 = vunpack.c.l.b16 %v271
        %v368 = vunpack.c.l.b16 %v272
        %v369 = vunpack.c.l.b16 %v273
        %v370 = vunpack.c.l.b16 %v274
        %v371 = vunpack.c.l.b16 %v275
        %v372 = vunpack.c.l.b16 %v276
        %v373 = vunpack.c.l.b16 %v277
        %v374 = vunpack.c.l.b16 %v278
        %v375 = vunpack.c.l.b16 %v279
        %v376 = vunpack.c.l.b16 %v280
        %v377 = vunpack.c.l.b16 %v281
        %v378 = vunpack.c.l.b16 %v282
        %v379 = vunpack.c.l.b16 %v283
        %v380 = vunpack.c.l.b16 %v284
        %v381 = vunpack.c.l.b16 %v285
        %v382 = vunpack.c.l.b16 %v286
        %v383 = vunpack.c.l.b16 %v287
        %v384 = vunpack.c.l.b16 %v288
        %v385 = vunpack.c.l.b16 %v289
        %v386 = vunpack.c.l.b16 %v290
        %v387 = vunpack.c.l.b16 %v291
        %v388 = vunpack.c.l.b16 %v292
        %v389 = vunpack.c.l.b16 %v293
        %v390 = vunpack.c.l.b16 %v294
        %v391 = vunpack.c.l.b16 %v295
        %v392 = vunpack.c.l.b16 %v296
        %v393 = vunpack.c.l.b16 %v297
        %v394 = vunpack.c.l.b16 %v298
        %v395 = vunpack.c.l.b16 %v299
        %v396 = vunpack.c.l.b16 %v300
        %v397 = vunpack.c.l.b16 %v301
        %v398 = vunpack.c.l.b16 %v302
        %v399 = vunpack.c.l.b16 %v303
        %v400 = vunpack.c.l.b16 %v304
        %v401 = vunpack.c.l.b16 %v305
        %v402 = vpack.c.b16 %v355, %v354
        %v403 = vpack.c.b16 %v357, %v356
        %v404 = vpack.c.b16 %v359, %v358
        %v405 = vpack.c.b16 %v361, %v360
        %v406 = vpack.c.b16 %v363, %v362
        %v407 = vpack.c.b16 %v365, %v364
        %v408 = vpack.c.b16 %v367, %v366
        %v409 = vpack.c.b16 %v369, %v368
        %v410 = vpack.c.b16 %v371, %v370
        %v411 = vpack.c.b16 %v373, %v372
        %v412 = vpack.c.b16 %v375, %v374
        %v413 = vpack.c.b16 %v377, %v376
        %v414 = vpack.c.b16 %v379, %v378
        %v415 = vpack.c.b16 %v381, %v380
        %v416 = vpack.c.b16 %v383, %v382
        %v417 = vpack.c.b16 %v385, %v384
        %v418 = vpack.c.b16 %v387, %v386
        %v419 = vpack.c.b16 %v389, %v388
        %v420 = vpack.c.b16 %v391, %v390
        %v421 = vpack.c.b16 %v393, %v392
        %v422 = vpack.c.b16 %v395, %v394
        %v423 = vpack.c.b16 %v397, %v396
        %v424 = vpack.c.b16 %v399, %v398
        %v425 = vpack.c.b16 %v401, %v400
        %450 = vmatprep.subr.bf16.mxu0 0
        %451 = vmatpush1.bf16.xpose.msra.mxu0 0
        %452 = vmatprep.subr.bf16.mxu0 0
        %453 = vmatpush1.bf16.xpose.msra.mxu0 0
        %454 = vmatprep.subr.bf16.mxu0 0
        %455 = vmatpush1.bf16.xpose.msra.mxu0 0
        %456 = vmatprep.subr.bf16.mxu0 0
        %457 = vmatpush1.bf16.xpose.msra.mxu0 0
        %458 = vmatprep.subr.bf16.mxu0 0
        %459 = vmatpush1.bf16.xpose.msra.mxu0 %v257
        %460 = vmatprep.subr.bf16.mxu0 0
        %461 = vmatpush1.bf16.xpose.msra.mxu0 %v256
        %462 = vmatprep.subr.bf16.mxu0 0
        %463 = vmatpush1.bf16.xpose.msra.mxu0 %v255
        %464 = vmatprep.subr.bf16.mxu0 0
        %465 = vmatpush1.bf16.xpose.msra.mxu0 %v254
        %466 = vmatprep.subr.bf16.mxu0 0
        %467 = vmatpush2.bf16.xpose.msra.mxu0 0
        %468 = vmatprep.subr.bf16.mxu0 0
        %469 = vmatpush2.bf16.xpose.msra.mxu0 0
        %470 = vmatprep.subr.bf16.mxu0 0
        %471 = vmatpush2.bf16.xpose.msra.mxu0 0
        %472 = vmatprep.subr.bf16.mxu0 0
        %473 = vmatpush2.bf16.xpose.msra.mxu0 0
        %474 = vmatprep.subr.bf16.mxu0 0
        %475 = vmatpush2.bf16.xpose.msra.mxu0 0
        %476 = vmatprep.subr.bf16.mxu0 0
        %477 = vmatpush2.bf16.xpose.msra.mxu0 0
        %478 = vmatprep.subr.bf16.mxu0 0
        %479 = vmatpush2.bf16.xpose.msra.mxu0 0
        %480 = vmatprep.subr.bf16.mxu0 0
        %481 = vmatpush2.bf16.xpose.msra.mxu0 0
        %482 = vmatprep.mubr.bf16.mxu0 0
        %483 = vmatmul.mubr.bf16.gmra.mxu0 %v402
        %v484 = vpop.f32.mrf.mxu0
        %v485 = vadd.f32 0.0, %v484
        %v486 = vpop.f32.mrf.mxu0
        %v487 = vpop.f32.mrf.mxu0
        %v488 = vadd.f32 0.0, %v487
        %v489 = vpop.f32.mrf.mxu0
        %490 = vmatprep.mubr.bf16.mxu0 0
        %491 = vmatmul.mubr.bf16.gmra.mxu0 %v403
        %v492 = vpop.f32.mrf.mxu0
        %v493 = vadd.f32 0.0, %v492
        %v494 = vpop.f32.mrf.mxu0
        %v495 = vpop.f32.mrf.mxu0
        %v496 = vadd.f32 0.0, %v495
        %v497 = vpop.f32.mrf.mxu0
        %498 = vmatprep.mubr.bf16.mxu0 0
        %499 = vmatmul.mubr.bf16.gmra.mxu0 %v404
        %v500 = vpop.f32.mrf.mxu0
        %v501 = vadd.f32 0.0, %v500
        %v502 = vpop.f32.mrf.mxu0
        %v503 = vpop.f32.mrf.mxu0
        %v504 = vadd.f32 0.0, %v503
        %v505 = vpop.f32.mrf.mxu0
        %506 = vmatprep.mubr.bf16.mxu0 0
        %507 = vmatmul.mubr.bf16.gmra.mxu0 %v405
        %v508 = vpop.f32.mrf.mxu0
        %v509 = vadd.f32 0.0, %v508
        %v510 = vpop.f32.mrf.mxu0
        %v511 = vpop.f32.mrf.mxu0
        %v512 = vadd.f32 0.0, %v511
        %v513 = vpop.f32.mrf.mxu0
        %514 = vmatprep.mubr.bf16.mxu0 0
        %515 = vmatmul.mubr.bf16.gmra.mxu0 %v406
        %v516 = vpop.f32.mrf.mxu0
        %v517 = vadd.f32 0.0, %v516
        %v518 = vpop.f32.mrf.mxu0
        %v519 = vpop.f32.mrf.mxu0
        %v520 = vadd.f32 0.0, %v519
        %v521 = vpop.f32.mrf.mxu0
        %522 = vmatprep.mubr.bf16.mxu0 0
        %523 = vmatmul.mubr.bf16.gmra.mxu0 %v407
        %v524 = vpop.f32.mrf.mxu0
        %v525 = vadd.f32 0.0, %v524
        %v526 = vpop.f32.mrf.mxu0
        %v527 = vpop.f32.mrf.mxu0
        %v528 = vadd.f32 0.0, %v527
        %v529 = vpop.f32.mrf.mxu0
        %530 = vmatprep.mubr.bf16.mxu0 0
        %531 = vmatmul.mubr.bf16.gmra.mxu0 %v408
        %v532 = vpop.f32.mrf.mxu0
        %v533 = vadd.f32 0.0, %v532
        %v534 = vpop.f32.mrf.mxu0
        %v535 = vpop.f32.mrf.mxu0
        %v536 = vadd.f32 0.0, %v535
        %v537 = vpop.f32.mrf.mxu0
        %538 = vmatprep.mubr.bf16.mxu0 0
        %539 = vmatmul.mubr.bf16.gmra.mxu0 %v409
        %v540 = vpop.f32.mrf.mxu0
        %v541 = vadd.f32 0.0, %v540
        %v542 = vpop.f32.mrf.mxu0
        %v543 = vpop.f32.mrf.mxu0
        %v544 = vadd.f32 0.0, %v543
        %v545 = vpop.f32.mrf.mxu0
        %546 = vmatprep.mubr.bf16.mxu0 0
        %547 = vmatmul.mubr.bf16.gmra.mxu0 %v410
        %v548 = vpop.f32.mrf.mxu0
        %v549 = vadd.f32 0.0, %v548
        %v550 = vpop.f32.mrf.mxu0
        %v551 = vpop.f32.mrf.mxu0
        %v552 = vadd.f32 0.0, %v551
        %v553 = vpop.f32.mrf.mxu0
        %554 = vmatprep.mubr.bf16.mxu0 0
        %555 = vmatmul.mubr.bf16.gmra.mxu0 %v411
        %v556 = vpop.f32.mrf.mxu0
        %v557 = vadd.f32 0.0, %v556
        %v558 = vpop.f32.mrf.mxu0
        %v559 = vpop.f32.mrf.mxu0
        %v560 = vadd.f32 0.0, %v559
        %v561 = vpop.f32.mrf.mxu0
        %562 = vmatprep.mubr.bf16.mxu0 0
        %563 = vmatmul.mubr.bf16.gmra.mxu0 %v412
        %v564 = vpop.f32.mrf.mxu0
        %v565 = vadd.f32 0.0, %v564
        %v566 = vpop.f32.mrf.mxu0
        %v567 = vpop.f32.mrf.mxu0
        %v568 = vadd.f32 0.0, %v567
        %v569 = vpop.f32.mrf.mxu0
        %570 = vmatprep.mubr.bf16.mxu0 0
        %571 = vmatmul.mubr.bf16.gmra.mxu0 %v413
        %v572 = vpop.f32.mrf.mxu0
        %v573 = vadd.f32 0.0, %v572
        %v574 = vpop.f32.mrf.mxu0
        %v575 = vpop.f32.mrf.mxu0
        %v576 = vadd.f32 0.0, %v575
        %v577 = vpop.f32.mrf.mxu0
        %578 = vmatprep.mubr.bf16.mxu0 0
        %579 = vmatmul.mubr.bf16.gmra.mxu0 %v414
        %v580 = vpop.f32.mrf.mxu0
        %v581 = vadd.f32 0.0, %v580
        %v582 = vpop.f32.mrf.mxu0
        %v583 = vpop.f32.mrf.mxu0
        %v584 = vadd.f32 0.0, %v583
        %v585 = vpop.f32.mrf.mxu0
        %586 = vmatprep.mubr.bf16.mxu0 0
        %587 = vmatmul.mubr.bf16.gmra.mxu0 %v415
        %v588 = vpop.f32.mrf.mxu0
        %v589 = vadd.f32 0.0, %v588
        %v590 = vpop.f32.mrf.mxu0
        %v591 = vpop.f32.mrf.mxu0
        %v592 = vadd.f32 0.0, %v591
        %v593 = vpop.f32.mrf.mxu0
        %594 = vmatprep.mubr.bf16.mxu0 0
        %595 = vmatmul.mubr.bf16.gmra.mxu0 %v416
        %v596 = vpop.f32.mrf.mxu0
        %v597 = vadd.f32 0.0, %v596
        %v598 = vpop.f32.mrf.mxu0
        %v599 = vpop.f32.mrf.mxu0
        %v600 = vadd.f32 0.0, %v599
        %v601 = vpop.f32.mrf.mxu0
        %602 = vmatprep.mubr.bf16.mxu0 0
        %603 = vmatmul.mubr.bf16.gmra.mxu0 %v417
        %v604 = vpop.f32.mrf.mxu0
        %v605 = vadd.f32 0.0, %v604
        %v606 = vpop.f32.mrf.mxu0
        %v607 = vpop.f32.mrf.mxu0
        %v608 = vadd.f32 0.0, %v607
        %v609 = vpop.f32.mrf.mxu0
        %610 = vmatprep.mubr.bf16.mxu0 0
        %611 = vmatmul.mubr.bf16.gmra.mxu0 %v418
        %v612 = vpop.f32.mrf.mxu0
        %v613 = vadd.f32 0.0, %v612
        %v614 = vpop.f32.mrf.mxu0
        %v615 = vpop.f32.mrf.mxu0
        %v616 = vadd.f32 0.0, %v615
        %v617 = vpop.f32.mrf.mxu0
        %618 = vmatprep.mubr.bf16.mxu0 0
        %619 = vmatmul.mubr.bf16.gmra.mxu0 %v419
        %v620 = vpop.f32.mrf.mxu0
        %v621 = vadd.f32 0.0, %v620
        %v622 = vpop.f32.mrf.mxu0
        %v623 = vpop.f32.mrf.mxu0
        %v624 = vadd.f32 0.0, %v623
        %v625 = vpop.f32.mrf.mxu0
        %626 = vmatprep.mubr.bf16.mxu0 0
        %627 = vmatmul.mubr.bf16.gmra.mxu0 %v420
        %v628 = vpop.f32.mrf.mxu0
        %v629 = vadd.f32 0.0, %v628
        %v630 = vpop.f32.mrf.mxu0
        %v631 = vpop.f32.mrf.mxu0
        %v632 = vadd.f32 0.0, %v631
        %v633 = vpop.f32.mrf.mxu0
        %634 = vmatprep.mubr.bf16.mxu0 0
        %635 = vmatmul.mubr.bf16.gmra.mxu0 %v421
        %v636 = vpop.f32.mrf.mxu0
        %v637 = vadd.f32 0.0, %v636
        %v638 = vpop.f32.mrf.mxu0
        %v639 = vpop.f32.mrf.mxu0
        %v640 = vadd.f32 0.0, %v639
        %v641 = vpop.f32.mrf.mxu0
        %642 = vmatprep.mubr.bf16.mxu0 0
        %643 = vmatmul.mubr.bf16.gmra.mxu0 %v422
        %v644 = vpop.f32.mrf.mxu0
        %v645 = vadd.f32 0.0, %v644
        %v646 = vpop.f32.mrf.mxu0
        %v647 = vpop.f32.mrf.mxu0
        %v648 = vadd.f32 0.0, %v647
        %v649 = vpop.f32.mrf.mxu0
        %650 = vmatprep.mubr.bf16.mxu0 0
        %651 = vmatmul.mubr.bf16.gmra.mxu0 %v423
        %v652 = vpop.f32.mrf.mxu0
        %v653 = vadd.f32 0.0, %v652
        %v654 = vpop.f32.mrf.mxu0
        %v655 = vpop.f32.mrf.mxu0
        %v656 = vadd.f32 0.0, %v655
        %v657 = vpop.f32.mrf.mxu0
        %658 = vmatprep.mubr.bf16.mxu0 0
        %659 = vmatmul.mubr.bf16.gmra.mxu0 %v424
        %v660 = vpop.f32.mrf.mxu0
        %v661 = vadd.f32 0.0, %v660
        %v662 = vpop.f32.mrf.mxu0
        %v663 = vpop.f32.mrf.mxu0
        %v664 = vadd.f32 0.0, %v663
        %v665 = vpop.f32.mrf.mxu0
        %666 = vmatprep.mubr.bf16.mxu0 0
        %667 = vmatmul.mubr.bf16.gmra.mxu0 %v425
        %v668 = vpop.f32.mrf.mxu0
        %v669 = vadd.f32 0.0, %v668
        %v670 = vpop.f32.mrf.mxu0
        %v671 = vpop.f32.mrf.mxu0
        %v672 = vadd.f32 0.0, %v671
        %v673 = vpop.f32.mrf.mxu0
        %674 = vdwg.mxu0
        %v675 = vpack.c.bf16 %v488, %v485
        %v676 = vpack.c.bf16 %v496, %v493
        %v677 = vpack.c.bf16 %v504, %v501
        %v678 = vpack.c.bf16 %v512, %v509
        %v679 = vpack.c.bf16 %v520, %v517
        %v680 = vpack.c.bf16 %v528, %v525
        %v681 = vpack.c.bf16 %v536, %v533
        %v682 = vpack.c.bf16 %v544, %v541
        %v683 = vpack.c.bf16 %v552, %v549
        %v684 = vpack.c.bf16 %v560, %v557
        %v685 = vpack.c.bf16 %v568, %v565
        %v686 = vpack.c.bf16 %v576, %v573
        %v687 = vpack.c.bf16 %v584, %v581
        %v688 = vpack.c.bf16 %v592, %v589
        %v689 = vpack.c.bf16 %v600, %v597
        %v690 = vpack.c.bf16 %v608, %v605
        %v691 = vpack.c.bf16 %v616, %v613
        %v692 = vpack.c.bf16 %v624, %v621
        %v693 = vpack.c.bf16 %v632, %v629
        %v694 = vpack.c.bf16 %v640, %v637
        %v695 = vpack.c.bf16 %v648, %v645
        %v696 = vpack.c.bf16 %v656, %v653
        %v697 = vpack.c.bf16 %v664, %v661
        %v698 = vpack.c.bf16 %v672, %v669
        %699 = vxpose.xlu0.c.b16.start [1/8] %v675, 128
        %700 = vxpose.xlu0.c.b16.cont [2/8] 0, 128
        %701 = vxpose.xlu0.c.b16.cont [3/8] 0, 128
        %702 = vxpose.xlu0.c.b16.cont [4/8] 0, 128
        %703 = vxpose.xlu0.c.b16.cont [5/8] 0, 128
        %704 = vxpose.xlu0.c.b16.cont [6/8] 0, 128
        %705 = vxpose.xlu0.c.b16.cont [7/8] 0, 128
        %706 = vxpose.xlu0.c.b16.end [8/8] 0, 128
        %v707 = vpop.trf.xlu0
        %v708 = vpop.trf.xlu0
        %v709 = vpop.trf.xlu0
        %v710 = vpop.trf.xlu0
        %v711 = vpop.trf.xlu0
        %v712 = vpop.trf.xlu0
        %v713 = vpop.trf.xlu0
        %v714 = vpop.trf.xlu0
        %vm715 = vcmask 130048
        %v717 = vsel %vm715, %v707, 0
        %v720 = vsel %vm715, %v708, 0
        %v723 = vsel %vm715, %v709, 0
        %v726 = vsel %vm715, %v710, 0
        %728 = vmatprep.subr.bf16.mxu0 0
        %729 = vmatpush1.bf16.msra.mxu0 0
        %730 = vmatprep.subr.bf16.mxu0 0
        %731 = vmatpush1.bf16.msra.mxu0 0
        %732 = vmatprep.subr.bf16.mxu0 0
        %733 = vmatpush1.bf16.msra.mxu0 0
        %734 = vmatprep.subr.bf16.mxu0 0
        %735 = vmatpush1.bf16.msra.mxu0 0
        %736 = vmatprep.subr.bf16.mxu0 0
        %737 = vmatpush1.bf16.msra.mxu0 0
        %738 = vmatprep.subr.bf16.mxu0 0
        %739 = vmatpush1.bf16.msra.mxu0 0
        %740 = vmatprep.subr.bf16.mxu0 0
        %741 = vmatpush1.bf16.msra.mxu0 0
        %742 = vmatprep.subr.bf16.mxu0 0
        %743 = vmatpush1.bf16.msra.mxu0 %v683
        %744 = vmatprep.subr.bf16.mxu0 0
        %745 = vmatpush2.bf16.msra.mxu0 0
        %746 = vmatprep.subr.bf16.mxu0 0
        %747 = vmatpush2.bf16.msra.mxu0 0
        %748 = vmatprep.subr.bf16.mxu0 0
        %749 = vmatpush2.bf16.msra.mxu0 0
        %750 = vmatprep.subr.bf16.mxu0 0
        %751 = vmatpush2.bf16.msra.mxu0 0
        %752 = vmatprep.subr.bf16.mxu0 0
        %753 = vmatpush2.bf16.msra.mxu0 0
        %754 = vmatprep.subr.bf16.mxu0 0
        %755 = vmatpush2.bf16.msra.mxu0 0
        %756 = vmatprep.subr.bf16.mxu0 0
        %757 = vmatpush2.bf16.msra.mxu0 0
        %758 = vmatprep.subr.bf16.mxu0 0
        %759 = vmatpush2.bf16.msra.mxu0 0
        %760 = vmatprep.mubr.bf16.mxu0 0
        %761 = vmatmul.mubr.bf16.gmra.mxu0 %v717
        %v762 = vpop.f32.mrf.mxu0
        %v763 = vadd.f32 0.0, %v762
        %v764 = vpop.f32.mrf.mxu0
        %v765 = vpop.f32.mrf.mxu0
        %v766 = vadd.f32 0.0, %v765
        %v767 = vpop.f32.mrf.mxu0
        %768 = vmatprep.mubr.bf16.mxu0 0
        %769 = vmatmul.mubr.bf16.gmra.mxu0 %v720
        %v770 = vpop.f32.mrf.mxu0
        %v771 = vadd.f32 0.0, %v770
        %v772 = vpop.f32.mrf.mxu0
        %v773 = vpop.f32.mrf.mxu0
        %v774 = vadd.f32 0.0, %v773
        %v775 = vpop.f32.mrf.mxu0
        %776 = vmatprep.mubr.bf16.mxu0 0
        %777 = vmatmul.mubr.bf16.gmra.mxu0 %v723
        %v778 = vpop.f32.mrf.mxu0
        %v779 = vadd.f32 0.0, %v778
        %v780 = vpop.f32.mrf.mxu0
        %v781 = vpop.f32.mrf.mxu0
        %v782 = vadd.f32 0.0, %v781
        %v783 = vpop.f32.mrf.mxu0
        %784 = vmatprep.mubr.bf16.mxu0 0
        %785 = vmatmul.mubr.bf16.gmra.mxu0 %v726
        %v786 = vpop.f32.mrf.mxu0
        %v787 = vadd.f32 0.0, %v786
        %v788 = vpop.f32.mrf.mxu0
        %v789 = vpop.f32.mrf.mxu0
        %v790 = vadd.f32 0.0, %v789
        %v791 = vpop.f32.mrf.mxu0
        %792 = vdwg.mxu0
        %793 = vxpose.xlu0.c.b16.start [1/8] %v676, 128
        %794 = vxpose.xlu0.c.b16.cont [2/8] 0, 128
        %795 = vxpose.xlu0.c.b16.cont [3/8] 0, 128
        %796 = vxpose.xlu0.c.b16.cont [4/8] 0, 128
        %797 = vxpose.xlu0.c.b16.cont [5/8] 0, 128
        %798 = vxpose.xlu0.c.b16.cont [6/8] 0, 128
        %799 = vxpose.xlu0.c.b16.cont [7/8] 0, 128
        %800 = vxpose.xlu0.c.b16.end [8/8] 0, 128
        %v801 = vpop.trf.xlu0
        %v802 = vpop.trf.xlu0
        %v803 = vpop.trf.xlu0
        %v804 = vpop.trf.xlu0
        %v805 = vpop.trf.xlu0
        %v806 = vpop.trf.xlu0
        %v807 = vpop.trf.xlu0
        %v808 = vpop.trf.xlu0
        %v810 = vsel %vm715, %v801, 0
        %v813 = vsel %vm715, %v802, 0
        %v816 = vsel %vm715, %v803, 0
        %v819 = vsel %vm715, %v804, 0
        %821 = vmatprep.subr.bf16.mxu0 0
        %822 = vmatpush1.bf16.msra.mxu0 0
        %823 = vmatprep.subr.bf16.mxu0 0
        %824 = vmatpush1.bf16.msra.mxu0 0
        %825 = vmatprep.subr.bf16.mxu0 0
        %826 = vmatpush1.bf16.msra.mxu0 0
        %827 = vmatprep.subr.bf16.mxu0 0
        %828 = vmatpush1.bf16.msra.mxu0 0
        %829 = vmatprep.subr.bf16.mxu0 0
        %830 = vmatpush1.bf16.msra.mxu0 0
        %831 = vmatprep.subr.bf16.mxu0 0
        %832 = vmatpush1.bf16.msra.mxu0 0
        %833 = vmatprep.subr.bf16.mxu0 0
        %834 = vmatpush1.bf16.msra.mxu0 0
        %835 = vmatprep.subr.bf16.mxu0 0
        %836 = vmatpush1.bf16.msra.mxu0 %v684
        %837 = vmatprep.subr.bf16.mxu0 0
        %838 = vmatpush2.bf16.msra.mxu0 0
        %839 = vmatprep.subr.bf16.mxu0 0
        %840 = vmatpush2.bf16.msra.mxu0 0
        %841 = vmatprep.subr.bf16.mxu0 0
        %842 = vmatpush2.bf16.msra.mxu0 0
        %843 = vmatprep.subr.bf16.mxu0 0
        %844 = vmatpush2.bf16.msra.mxu0 0
        %845 = vmatprep.subr.bf16.mxu0 0
        %846 = vmatpush2.bf16.msra.mxu0 0
        %847 = vmatprep.subr.bf16.mxu0 0
        %848 = vmatpush2.bf16.msra.mxu0 0
        %849 = vmatprep.subr.bf16.mxu0 0
        %850 = vmatpush2.bf16.msra.mxu0 0
        %851 = vmatprep.subr.bf16.mxu0 0
        %852 = vmatpush2.bf16.msra.mxu0 0
        %853 = vmatprep.mubr.bf16.mxu0 0
        %854 = vmatmul.mubr.bf16.gmra.mxu0 %v810
        %v855 = vpop.f32.mrf.mxu0
        %v856 = vadd.f32 0.0, %v855
        %v857 = vpop.f32.mrf.mxu0
        %v858 = vpop.f32.mrf.mxu0
        %v859 = vadd.f32 0.0, %v858
        %v860 = vpop.f32.mrf.mxu0
        %861 = vmatprep.mubr.bf16.mxu0 0
        %862 = vmatmul.mubr.bf16.gmra.mxu0 %v813
        %v863 = vpop.f32.mrf.mxu0
        %v864 = vadd.f32 0.0, %v863
        %v865 = vpop.f32.mrf.mxu0
        %v866 = vpop.f32.mrf.mxu0
        %v867 = vadd.f32 0.0, %v866
        %v868 = vpop.f32.mrf.mxu0
        %869 = vmatprep.mubr.bf16.mxu0 0
        %870 = vmatmul.mubr.bf16.gmra.mxu0 %v816
        %v871 = vpop.f32.mrf.mxu0
        %v872 = vadd.f32 0.0, %v871
        %v873 = vpop.f32.mrf.mxu0
        %v874 = vpop.f32.mrf.mxu0
        %v875 = vadd.f32 0.0, %v874
        %v876 = vpop.f32.mrf.mxu0
        %877 = vmatprep.mubr.bf16.mxu0 0
        %878 = vmatmul.mubr.bf16.gmra.mxu0 %v819
        %v879 = vpop.f32.mrf.mxu0
        %v880 = vadd.f32 0.0, %v879
        %v881 = vpop.f32.mrf.mxu0
        %v882 = vpop.f32.mrf.mxu0
        %v883 = vadd.f32 0.0, %v882
        %v884 = vpop.f32.mrf.mxu0
        %885 = vdwg.mxu0
        %886 = vxpose.xlu0.c.b16.start [1/8] %v677, 128
        %887 = vxpose.xlu0.c.b16.cont [2/8] 0, 128
        %888 = vxpose.xlu0.c.b16.cont [3/8] 0, 128
        %889 = vxpose.xlu0.c.b16.cont [4/8] 0, 128
        %890 = vxpose.xlu0.c.b16.cont [5/8] 0, 128
        %891 = vxpose.xlu0.c.b16.cont [6/8] 0, 128
        %892 = vxpose.xlu0.c.b16.cont [7/8] 0, 128
        %893 = vxpose.xlu0.c.b16.end [8/8] 0, 128
        %v894 = vpop.trf.xlu0
        %v895 = vpop.trf.xlu0
        %v896 = vpop.trf.xlu0
        %v897 = vpop.trf.xlu0
        %v898 = vpop.trf.xlu0
        %v899 = vpop.trf.xlu0
        %v900 = vpop.trf.xlu0
        %v901 = vpop.trf.xlu0
        %v903 = vsel %vm715, %v894, 0
        %v906 = vsel %vm715, %v895, 0
        %v909 = vsel %vm715, %v896, 0
        %v912 = vsel %vm715, %v897, 0
        %914 = vmatprep.subr.bf16.mxu0 0
        %915 = vmatpush1.bf16.msra.mxu0 0
        %916 = vmatprep.subr.bf16.mxu0 0
        %917 = vmatpush1.bf16.msra.mxu0 0
        %918 = vmatprep.subr.bf16.mxu0 0
        %919 = vmatpush1.bf16.msra.mxu0 0
        %920 = vmatprep.subr.bf16.mxu0 0
        %921 = vmatpush1.bf16.msra.mxu0 0
        %922 = vmatprep.subr.bf16.mxu0 0
        %923 = vmatpush1.bf16.msra.mxu0 0
        %924 = vmatprep.subr.bf16.mxu0 0
        %925 = vmatpush1.bf16.msra.mxu0 0
        %926 = vmatprep.subr.bf16.mxu0 0
        %927 = vmatpush1.bf16.msra.mxu0 0
        %928 = vmatprep.subr.bf16.mxu0 0
        %929 = vmatpush1.bf16.msra.mxu0 %v685
        %930 = vmatprep.subr.bf16.mxu0 0
        %931 = vmatpush2.bf16.msra.mxu0 0
        %932 = vmatprep.subr.bf16.mxu0 0
        %933 = vmatpush2.bf16.msra.mxu0 0
        %934 = vmatprep.subr.bf16.mxu0 0
        %935 = vmatpush2.bf16.msra.mxu0 0
        %936 = vmatprep.subr.bf16.mxu0 0
        %937 = vmatpush2.bf16.msra.mxu0 0
        %938 = vmatprep.subr.bf16.mxu0 0
        %939 = vmatpush2.bf16.msra.mxu0 0
        %940 = vmatprep.subr.bf16.mxu0 0
        %941 = vmatpush2.bf16.msra.mxu0 0
        %942 = vmatprep.subr.bf16.mxu0 0
        %943 = vmatpush2.bf16.msra.mxu0 0
        %944 = vmatprep.subr.bf16.mxu0 0
        %945 = vmatpush2.bf16.msra.mxu0 0
        %946 = vmatprep.mubr.bf16.mxu0 0
        %947 = vmatmul.mubr.bf16.gmra.mxu0 %v903
        %v948 = vpop.f32.mrf.mxu0
        %v949 = vadd.f32 0.0, %v948
        %v950 = vpop.f32.mrf.mxu0
        %v951 = vpop.f32.mrf.mxu0
        %v952 = vadd.f32 0.0, %v951
        %v953 = vpop.f32.mrf.mxu0
        %954 = vmatprep.mubr.bf16.mxu0 0
        %955 = vmatmul.mubr.bf16.gmra.mxu0 %v906
        %v956 = vpop.f32.mrf.mxu0
        %v957 = vadd.f32 0.0, %v956
        %v958 = vpop.f32.mrf.mxu0
        %v959 = vpop.f32.mrf.mxu0
        %v960 = vadd.f32 0.0, %v959
        %v961 = vpop.f32.mrf.mxu0
        %962 = vmatprep.mubr.bf16.mxu0 0
        %963 = vmatmul.mubr.bf16.gmra.mxu0 %v909
        %v964 = vpop.f32.mrf.mxu0
        %v965 = vadd.f32 0.0, %v964
        %v966 = vpop.f32.mrf.mxu0
        %v967 = vpop.f32.mrf.mxu0
        %v968 = vadd.f32 0.0, %v967
        %v969 = vpop.f32.mrf.mxu0
        %970 = vmatprep.mubr.bf16.mxu0 0
        %971 = vmatmul.mubr.bf16.gmra.mxu0 %v912
        %v972 = vpop.f32.mrf.mxu0
        %v973 = vadd.f32 0.0, %v972
        %v974 = vpop.f32.mrf.mxu0
        %v975 = vpop.f32.mrf.mxu0
        %v976 = vadd.f32 0.0, %v975
        %v977 = vpop.f32.mrf.mxu0
        %978 = vdwg.mxu0
        %979 = vxpose.xlu0.c.b16.start [1/8] %v678, 128
        %980 = vxpose.xlu0.c.b16.cont [2/8] 0, 128
        %981 = vxpose.xlu0.c.b16.cont [3/8] 0, 128
        %982 = vxpose.xlu0.c.b16.cont [4/8] 0, 128
        %983 = vxpose.xlu0.c.b16.cont [5/8] 0, 128
        %984 = vxpose.xlu0.c.b16.cont [6/8] 0, 128
        %985 = vxpose.xlu0.c.b16.cont [7/8] 0, 128
        %986 = vxpose.xlu0.c.b16.end [8/8] 0, 128
        %v987 = vpop.trf.xlu0
        %v988 = vpop.trf.xlu0
        %v989 = vpop.trf.xlu0
        %v990 = vpop.trf.xlu0
        %v991 = vpop.trf.xlu0
        %v992 = vpop.trf.xlu0
        %v993 = vpop.trf.xlu0
        %v994 = vpop.trf.xlu0
        %v996 = vsel %vm715, %v987, 0
        %v999 = vsel %vm715, %v988, 0
        %v1002 = vsel %vm715, %v989, 0
        %v1005 = vsel %vm715, %v990, 0
        %1007 = vmatprep.subr.bf16.mxu0 0
        %1008 = vmatpush1.bf16.msra.mxu0 0
        %1009 = vmatprep.subr.bf16.mxu0 0
        %1010 = vmatpush1.bf16.msra.mxu0 0
        %1011 = vmatprep.subr.bf16.mxu0 0
        %1012 = vmatpush1.bf16.msra.mxu0 0
        %1013 = vmatprep.subr.bf16.mxu0 0
        %1014 = vmatpush1.bf16.msra.mxu0 0
        %1015 = vmatprep.subr.bf16.mxu0 0
        %1016 = vmatpush1.bf16.msra.mxu0 0
        %1017 = vmatprep.subr.bf16.mxu0 0
        %1018 = vmatpush1.bf16.msra.mxu0 0
        %1019 = vmatprep.subr.bf16.mxu0 0
        %1020 = vmatpush1.bf16.msra.mxu0 0
        %1021 = vmatprep.subr.bf16.mxu0 0
        %1022 = vmatpush1.bf16.msra.mxu0 %v686
        %1023 = vmatprep.subr.bf16.mxu0 0
        %1024 = vmatpush2.bf16.msra.mxu0 0
        %1025 = vmatprep.subr.bf16.mxu0 0
        %1026 = vmatpush2.bf16.msra.mxu0 0
        %1027 = vmatprep.subr.bf16.mxu0 0
        %1028 = vmatpush2.bf16.msra.mxu0 0
        %1029 = vmatprep.subr.bf16.mxu0 0
        %1030 = vmatpush2.bf16.msra.mxu0 0
        %1031 = vmatprep.subr.bf16.mxu0 0
        %1032 = vmatpush2.bf16.msra.mxu0 0
        %1033 = vmatprep.subr.bf16.mxu0 0
        %1034 = vmatpush2.bf16.msra.mxu0 0
        %1035 = vmatprep.subr.bf16.mxu0 0
        %1036 = vmatpush2.bf16.msra.mxu0 0
        %1037 = vmatprep.subr.bf16.mxu0 0
        %1038 = vmatpush2.bf16.msra.mxu0 0
        %1039 = vmatprep.mubr.bf16.mxu0 0
        %1040 = vmatmul.mubr.bf16.gmra.mxu0 %v996
        %v1041 = vpop.f32.mrf.mxu0
        %v1042 = vadd.f32 0.0, %v1041
        %v1043 = vpop.f32.mrf.mxu0
        %v1044 = vpop.f32.mrf.mxu0
        %v1045 = vadd.f32 0.0, %v1044
        %v1046 = vpop.f32.mrf.mxu0
        %1047 = vmatprep.mubr.bf16.mxu0 0
        %1048 = vmatmul.mubr.bf16.gmra.mxu0 %v999
        %v1049 = vpop.f32.mrf.mxu0
        %v1050 = vadd.f32 0.0, %v1049
        %v1051 = vpop.f32.mrf.mxu0
        %v1052 = vpop.f32.mrf.mxu0
        %v1053 = vadd.f32 0.0, %v1052
        %v1054 = vpop.f32.mrf.mxu0
        %1055 = vmatprep.mubr.bf16.mxu0 0
        %1056 = vmatmul.mubr.bf16.gmra.mxu0 %v1002
        %v1057 = vpop.f32.mrf.mxu0
        %v1058 = vadd.f32 0.0, %v1057
        %v1059 = vpop.f32.mrf.mxu0
        %v1060 = vpop.f32.mrf.mxu0
        %v1061 = vadd.f32 0.0, %v1060
        %v1062 = vpop.f32.mrf.mxu0
        %1063 = vmatprep.mubr.bf16.mxu0 0
        %1064 = vmatmul.mubr.bf16.gmra.mxu0 %v1005
        %v1065 = vpop.f32.mrf.mxu0
        %v1066 = vadd.f32 0.0, %v1065
        %v1067 = vpop.f32.mrf.mxu0
        %v1068 = vpop.f32.mrf.mxu0
        %v1069 = vadd.f32 0.0, %v1068
        %v1070 = vpop.f32.mrf.mxu0
        %1071 = vdwg.mxu0
        %1072 = vxpose.xlu0.c.b16.start [1/8] %v679, 128
        %1073 = vxpose.xlu0.c.b16.cont [2/8] 0, 128
        %1074 = vxpose.xlu0.c.b16.cont [3/8] 0, 128
        %1075 = vxpose.xlu0.c.b16.cont [4/8] 0, 128
        %1076 = vxpose.xlu0.c.b16.cont [5/8] 0, 128
        %1077 = vxpose.xlu0.c.b16.cont [6/8] 0, 128
        %1078 = vxpose.xlu0.c.b16.cont [7/8] 0, 128
        %1079 = vxpose.xlu0.c.b16.end [8/8] 0, 128
        %v1080 = vpop.trf.xlu0
        %v1081 = vpop.trf.xlu0
        %v1082 = vpop.trf.xlu0
        %v1083 = vpop.trf.xlu0
        %v1084 = vpop.trf.xlu0
        %v1085 = vpop.trf.xlu0
        %v1086 = vpop.trf.xlu0
        %v1087 = vpop.trf.xlu0
        %v1089 = vsel %vm715, %v1080, 0
        %v1092 = vsel %vm715, %v1081, 0
        %v1095 = vsel %vm715, %v1082, 0
        %v1098 = vsel %vm715, %v1083, 0
        %1100 = vmatprep.subr.bf16.mxu0 0
        %1101 = vmatpush1.bf16.msra.mxu0 0
        %1102 = vmatprep.subr.bf16.mxu0 0
        %1103 = vmatpush1.bf16.msra.mxu0 0
        %1104 = vmatprep.subr.bf16.mxu0 0
        %1105 = vmatpush1.bf16.msra.mxu0 0
        %1106 = vmatprep.subr.bf16.mxu0 0
        %1107 = vmatpush1.bf16.msra.mxu0 0
        %1108 = vmatprep.subr.bf16.mxu0 0
        %1109 = vmatpush1.bf16.msra.mxu0 0
        %1110 = vmatprep.subr.bf16.mxu0 0
        %1111 = vmatpush1.bf16.msra.mxu0 0
        %1112 = vmatprep.subr.bf16.mxu0 0
        %1113 = vmatpush1.bf16.msra.mxu0 0
        %1114 = vmatprep.subr.bf16.mxu0 0
        %1115 = vmatpush1.bf16.msra.mxu0 %v687
        %1116 = vmatprep.subr.bf16.mxu0 0
        %1117 = vmatpush2.bf16.msra.mxu0 0
        %1118 = vmatprep.subr.bf16.mxu0 0
        %1119 = vmatpush2.bf16.msra.mxu0 0
        %1120 = vmatprep.subr.bf16.mxu0 0
        %1121 = vmatpush2.bf16.msra.mxu0 0
        %1122 = vmatprep.subr.bf16.mxu0 0
        %1123 = vmatpush2.bf16.msra.mxu0 0
        %1124 = vmatprep.subr.bf16.mxu0 0
        %1125 = vmatpush2.bf16.msra.mxu0 0
        %1126 = vmatprep.subr.bf16.mxu0 0
        %1127 = vmatpush2.bf16.msra.mxu0 0
        %1128 = vmatprep.subr.bf16.mxu0 0
        %1129 = vmatpush2.bf16.msra.mxu0 0
        %1130 = vmatprep.subr.bf16.mxu0 0
        %1131 = vmatpush2.bf16.msra.mxu0 0
        %1132 = vmatprep.mubr.bf16.mxu0 0
        %1133 = vmatmul.mubr.bf16.gmra.mxu0 %v1089
        %v1134 = vpop.f32.mrf.mxu0
        %v1135 = vadd.f32 0.0, %v1134
        %v1136 = vpop.f32.mrf.mxu0
        %v1137 = vpop.f32.mrf.mxu0
        %v1138 = vadd.f32 0.0, %v1137
        %v1139 = vpop.f32.mrf.mxu0
        %1140 = vmatprep.mubr.bf16.mxu0 0
        %1141 = vmatmul.mubr.bf16.gmra.mxu0 %v1092
        %v1142 = vpop.f32.mrf.mxu0
        %v1143 = vadd.f32 0.0, %v1142
        %v1144 = vpop.f32.mrf.mxu0
        %v1145 = vpop.f32.mrf.mxu0
        %v1146 = vadd.f32 0.0, %v1145
        %v1147 = vpop.f32.mrf.mxu0
        %1148 = vmatprep.mubr.bf16.mxu0 0
        %1149 = vmatmul.mubr.bf16.gmra.mxu0 %v1095
        %v1150 = vpop.f32.mrf.mxu0
        %v1151 = vadd.f32 0.0, %v1150
        %v1152 = vpop.f32.mrf.mxu0
        %v1153 = vpop.f32.mrf.mxu0
        %v1154 = vadd.f32 0.0, %v1153
        %v1155 = vpop.f32.mrf.mxu0
        %1156 = vmatprep.mubr.bf16.mxu0 0
        %1157 = vmatmul.mubr.bf16.gmra.mxu0 %v1098
        %v1158 = vpop.f32.mrf.mxu0
        %v1159 = vadd.f32 0.0, %v1158
        %v1160 = vpop.f32.mrf.mxu0
        %v1161 = vpop.f32.mrf.mxu0
        %v1162 = vadd.f32 0.0, %v1161
        %v1163 = vpop.f32.mrf.mxu0
        %1164 = vdwg.mxu0
        %1165 = vxpose.xlu0.c.b16.start [1/8] %v680, 128
        %1166 = vxpose.xlu0.c.b16.cont [2/8] 0, 128
        %1167 = vxpose.xlu0.c.b16.cont [3/8] 0, 128
        %1168 = vxpose.xlu0.c.b16.cont [4/8] 0, 128
        %1169 = vxpose.xlu0.c.b16.cont [5/8] 0, 128
        %1170 = vxpose.xlu0.c.b16.cont [6/8] 0, 128
        %1171 = vxpose.xlu0.c.b16.cont [7/8] 0, 128
        %1172 = vxpose.xlu0.c.b16.end [8/8] 0, 128
        %v1173 = vpop.trf.xlu0
        %v1174 = vpop.trf.xlu0
        %v1175 = vpop.trf.xlu0
        %v1176 = vpop.trf.xlu0
        %v1177 = vpop.trf.xlu0
        %v1178 = vpop.trf.xlu0
        %v1179 = vpop.trf.xlu0
        %v1180 = vpop.trf.xlu0
        %v1182 = vsel %vm715, %v1173, 0
        %v1185 = vsel %vm715, %v1174, 0
        %v1188 = vsel %vm715, %v1175, 0
        %v1191 = vsel %vm715, %v1176, 0
        %1193 = vmatprep.subr.bf16.mxu0 0
        %1194 = vmatpush1.bf16.msra.mxu0 0
        %1195 = vmatprep.subr.bf16.mxu0 0
        %1196 = vmatpush1.bf16.msra.mxu0 0
        %1197 = vmatprep.subr.bf16.mxu0 0
        %1198 = vmatpush1.bf16.msra.mxu0 0
        %1199 = vmatprep.subr.bf16.mxu0 0
        %1200 = vmatpush1.bf16.msra.mxu0 0
        %1201 = vmatprep.subr.bf16.mxu0 0
        %1202 = vmatpush1.bf16.msra.mxu0 0
        %1203 = vmatprep.subr.bf16.mxu0 0
        %1204 = vmatpush1.bf16.msra.mxu0 0
        %1205 = vmatprep.subr.bf16.mxu0 0
        %1206 = vmatpush1.bf16.msra.mxu0 0
        %1207 = vmatprep.subr.bf16.mxu0 0
        %1208 = vmatpush1.bf16.msra.mxu0 %v688
        %1209 = vmatprep.subr.bf16.mxu0 0
        %1210 = vmatpush2.bf16.msra.mxu0 0
        %1211 = vmatprep.subr.bf16.mxu0 0
        %1212 = vmatpush2.bf16.msra.mxu0 0
        %1213 = vmatprep.subr.bf16.mxu0 0
        %1214 = vmatpush2.bf16.msra.mxu0 0
        %1215 = vmatprep.subr.bf16.mxu0 0
        %1216 = vmatpush2.bf16.msra.mxu0 0
        %1217 = vmatprep.subr.bf16.mxu0 0
        %1218 = vmatpush2.bf16.msra.mxu0 0
        %1219 = vmatprep.subr.bf16.mxu0 0
        %1220 = vmatpush2.bf16.msra.mxu0 0
        %1221 = vmatprep.subr.bf16.mxu0 0
        %1222 = vmatpush2.bf16.msra.mxu0 0
        %1223 = vmatprep.subr.bf16.mxu0 0
        %1224 = vmatpush2.bf16.msra.mxu0 0
        %1225 = vmatprep.mubr.bf16.mxu0 0
        %1226 = vmatmul.mubr.bf16.gmra.mxu0 %v1182
        %v1227 = vpop.f32.mrf.mxu0
        %v1228 = vadd.f32 0.0, %v1227
        %v1229 = vpop.f32.mrf.mxu0
        %v1230 = vpop.f32.mrf.mxu0
        %v1231 = vadd.f32 0.0, %v1230
        %v1232 = vpop.f32.mrf.mxu0
        %1233 = vmatprep.mubr.bf16.mxu0 0
        %1234 = vmatmul.mubr.bf16.gmra.mxu0 %v1185
        %v1235 = vpop.f32.mrf.mxu0
        %v1236 = vadd.f32 0.0, %v1235
        %v1237 = vpop.f32.mrf.mxu0
        %v1238 = vpop.f32.mrf.mxu0
        %v1239 = vadd.f32 0.0, %v1238
        %v1240 = vpop.f32.mrf.mxu0
        %1241 = vmatprep.mubr.bf16.mxu0 0
        %1242 = vmatmul.mubr.bf16.gmra.mxu0 %v1188
        %v1243 = vpop.f32.mrf.mxu0
        %v1244 = vadd.f32 0.0, %v1243
        %v1245 = vpop.f32.mrf.mxu0
        %v1246 = vpop.f32.mrf.mxu0
        %v1247 = vadd.f32 0.0, %v1246
        %v1248 = vpop.f32.mrf.mxu0
        %1249 = vmatprep.mubr.bf16.mxu0 0
        %1250 = vmatmul.mubr.bf16.gmra.mxu0 %v1191
        %v1251 = vpop.f32.mrf.mxu0
        %v1252 = vadd.f32 0.0, %v1251
        %v1253 = vpop.f32.mrf.mxu0
        %v1254 = vpop.f32.mrf.mxu0
        %v1255 = vadd.f32 0.0, %v1254
        %v1256 = vpop.f32.mrf.mxu0
        %1257 = vdwg.mxu0
        %1258 = vxpose.xlu0.c.b16.start [1/8] %v681, 128
        %1259 = vxpose.xlu0.c.b16.cont [2/8] 0, 128
        %1260 = vxpose.xlu0.c.b16.cont [3/8] 0, 128
        %1261 = vxpose.xlu0.c.b16.cont [4/8] 0, 128
        %1262 = vxpose.xlu0.c.b16.cont [5/8] 0, 128
        %1263 = vxpose.xlu0.c.b16.cont [6/8] 0, 128
        %1264 = vxpose.xlu0.c.b16.cont [7/8] 0, 128
        %1265 = vxpose.xlu0.c.b16.end [8/8] 0, 128
        %v1266 = vpop.trf.xlu0
        %v1267 = vpop.trf.xlu0
        %v1268 = vpop.trf.xlu0
        %v1269 = vpop.trf.xlu0
        %v1270 = vpop.trf.xlu0
        %v1271 = vpop.trf.xlu0
        %v1272 = vpop.trf.xlu0
        %v1273 = vpop.trf.xlu0
        %v1275 = vsel %vm715, %v1266, 0
        %v1278 = vsel %vm715, %v1267, 0
        %v1281 = vsel %vm715, %v1268, 0
        %v1284 = vsel %vm715, %v1269, 0
        %1286 = vmatprep.subr.bf16.mxu0 0
        %1287 = vmatpush1.bf16.msra.mxu0 0
        %1288 = vmatprep.subr.bf16.mxu0 0
        %1289 = vmatpush1.bf16.msra.mxu0 0
        %1290 = vmatprep.subr.bf16.mxu0 0
        %1291 = vmatpush1.bf16.msra.mxu0 0
        %1292 = vmatprep.subr.bf16.mxu0 0
        %1293 = vmatpush1.bf16.msra.mxu0 0
        %1294 = vmatprep.subr.bf16.mxu0 0
        %1295 = vmatpush1.bf16.msra.mxu0 0
        %1296 = vmatprep.subr.bf16.mxu0 0
        %1297 = vmatpush1.bf16.msra.mxu0 0
        %1298 = vmatprep.subr.bf16.mxu0 0
        %1299 = vmatpush1.bf16.msra.mxu0 0
        %1300 = vmatprep.subr.bf16.mxu0 0
        %1301 = vmatpush1.bf16.msra.mxu0 %v689
        %1302 = vmatprep.subr.bf16.mxu0 0
        %1303 = vmatpush2.bf16.msra.mxu0 0
        %1304 = vmatprep.subr.bf16.mxu0 0
        %1305 = vmatpush2.bf16.msra.mxu0 0
        %1306 = vmatprep.subr.bf16.mxu0 0
        %1307 = vmatpush2.bf16.msra.mxu0 0
        %1308 = vmatprep.subr.bf16.mxu0 0
        %1309 = vmatpush2.bf16.msra.mxu0 0
        %1310 = vmatprep.subr.bf16.mxu0 0
        %1311 = vmatpush2.bf16.msra.mxu0 0
        %1312 = vmatprep.subr.bf16.mxu0 0
        %1313 = vmatpush2.bf16.msra.mxu0 0
        %1314 = vmatprep.subr.bf16.mxu0 0
        %1315 = vmatpush2.bf16.msra.mxu0 0
        %1316 = vmatprep.subr.bf16.mxu0 0
        %1317 = vmatpush2.bf16.msra.mxu0 0
        %1318 = vmatprep.mubr.bf16.mxu0 0
        %1319 = vmatmul.mubr.bf16.gmra.mxu0 %v1275
        %v1320 = vpop.f32.mrf.mxu0
        %v1321 = vadd.f32 0.0, %v1320
        %v1322 = vpop.f32.mrf.mxu0
        %v1323 = vpop.f32.mrf.mxu0
        %v1324 = vadd.f32 0.0, %v1323
        %v1325 = vpop.f32.mrf.mxu0
        %1326 = vmatprep.mubr.bf16.mxu0 0
        %1327 = vmatmul.mubr.bf16.gmra.mxu0 %v1278
        %v1328 = vpop.f32.mrf.mxu0
        %v1329 = vadd.f32 0.0, %v1328
        %v1330 = vpop.f32.mrf.mxu0
        %v1331 = vpop.f32.mrf.mxu0
        %v1332 = vadd.f32 0.0, %v1331
        %v1333 = vpop.f32.mrf.mxu0
        %1334 = vmatprep.mubr.bf16.mxu0 0
        %1335 = vmatmul.mubr.bf16.gmra.mxu0 %v1281
        %v1336 = vpop.f32.mrf.mxu0
        %v1337 = vadd.f32 0.0, %v1336
        %v1338 = vpop.f32.mrf.mxu0
        %v1339 = vpop.f32.mrf.mxu0
        %v1340 = vadd.f32 0.0, %v1339
        %v1341 = vpop.f32.mrf.mxu0
        %1342 = vmatprep.mubr.bf16.mxu0 0
        %1343 = vmatmul.mubr.bf16.gmra.mxu0 %v1284
        %v1344 = vpop.f32.mrf.mxu0
        %v1345 = vadd.f32 0.0, %v1344
        %v1346 = vpop.f32.mrf.mxu0
        %v1347 = vpop.f32.mrf.mxu0
        %v1348 = vadd.f32 0.0, %v1347
        %v1349 = vpop.f32.mrf.mxu0
        %1350 = vdwg.mxu0
        %1351 = vxpose.xlu0.c.b16.start [1/8] %v682, 128
        %1352 = vxpose.xlu0.c.b16.cont [2/8] 0, 128
        %1353 = vxpose.xlu0.c.b16.cont [3/8] 0, 128
        %1354 = vxpose.xlu0.c.b16.cont [4/8] 0, 128
        %1355 = vxpose.xlu0.c.b16.cont [5/8] 0, 128
        %1356 = vxpose.xlu0.c.b16.cont [6/8] 0, 128
        %1357 = vxpose.xlu0.c.b16.cont [7/8] 0, 128
        %1358 = vxpose.xlu0.c.b16.end [8/8] 0, 128
        %v1359 = vpop.trf.xlu0
        %v1360 = vpop.trf.xlu0
        %v1361 = vpop.trf.xlu0
        %v1362 = vpop.trf.xlu0
        %v1363 = vpop.trf.xlu0
        %v1364 = vpop.trf.xlu0
        %v1365 = vpop.trf.xlu0
        %v1366 = vpop.trf.xlu0
        %v1368 = vsel %vm715, %v1359, 0
        %v1371 = vsel %vm715, %v1360, 0
        %v1374 = vsel %vm715, %v1361, 0
        %v1377 = vsel %vm715, %v1362, 0
        %1379 = vmatprep.subr.bf16.mxu0 0
        %1380 = vmatpush1.bf16.msra.mxu0 0
        %1381 = vmatprep.subr.bf16.mxu0 0
        %1382 = vmatpush1.bf16.msra.mxu0 0
        %1383 = vmatprep.subr.bf16.mxu0 0
        %1384 = vmatpush1.bf16.msra.mxu0 0
        %1385 = vmatprep.subr.bf16.mxu0 0
        %1386 = vmatpush1.bf16.msra.mxu0 0
        %1387 = vmatprep.subr.bf16.mxu0 0
        %1388 = vmatpush1.bf16.msra.mxu0 0
        %1389 = vmatprep.subr.bf16.mxu0 0
        %1390 = vmatpush1.bf16.msra.mxu0 0
        %1391 = vmatprep.subr.bf16.mxu0 0
        %1392 = vmatpush1.bf16.msra.mxu0 0
        %1393 = vmatprep.subr.bf16.mxu0 0
        %1394 = vmatpush1.bf16.msra.mxu0 %v690
        %1395 = vmatprep.subr.bf16.mxu0 0
        %1396 = vmatpush2.bf16.msra.mxu0 0
        %1397 = vmatprep.subr.bf16.mxu0 0
        %1398 = vmatpush2.bf16.msra.mxu0 0
        %1399 = vmatprep.subr.bf16.mxu0 0
        %1400 = vmatpush2.bf16.msra.mxu0 0
        %1401 = vmatprep.subr.bf16.mxu0 0
        %1402 = vmatpush2.bf16.msra.mxu0 0
        %1403 = vmatprep.subr.bf16.mxu0 0
        %1404 = vmatpush2.bf16.msra.mxu0 0
        %1405 = vmatprep.subr.bf16.mxu0 0
        %1406 = vmatpush2.bf16.msra.mxu0 0
        %1407 = vmatprep.subr.bf16.mxu0 0
        %1408 = vmatpush2.bf16.msra.mxu0 0
        %1409 = vmatprep.subr.bf16.mxu0 0
        %1410 = vmatpush2.bf16.msra.mxu0 0
        %1411 = vmatprep.mubr.bf16.mxu0 0
        %1412 = vmatmul.mubr.bf16.gmra.mxu0 %v1368
        %v1413 = vpop.f32.mrf.mxu0
        %v1414 = vadd.f32 0.0, %v1413
        %v1415 = vpop.f32.mrf.mxu0
        %v1416 = vpop.f32.mrf.mxu0
        %v1417 = vadd.f32 0.0, %v1416
        %v1418 = vpop.f32.mrf.mxu0
        %1419 = vmatprep.mubr.bf16.mxu0 0
        %1420 = vmatmul.mubr.bf16.gmra.mxu0 %v1371
        %v1421 = vpop.f32.mrf.mxu0
        %v1422 = vadd.f32 0.0, %v1421
        %v1423 = vpop.f32.mrf.mxu0
        %v1424 = vpop.f32.mrf.mxu0
        %v1425 = vadd.f32 0.0, %v1424
        %v1426 = vpop.f32.mrf.mxu0
        %1427 = vmatprep.mubr.bf16.mxu0 0
        %1428 = vmatmul.mubr.bf16.gmra.mxu0 %v1374
        %v1429 = vpop.f32.mrf.mxu0
        %v1430 = vadd.f32 0.0, %v1429
        %v1431 = vpop.f32.mrf.mxu0
        %v1432 = vpop.f32.mrf.mxu0
        %v1433 = vadd.f32 0.0, %v1432
        %v1434 = vpop.f32.mrf.mxu0
        %1435 = vmatprep.mubr.bf16.mxu0 0
        %1436 = vmatmul.mubr.bf16.gmra.mxu0 %v1377
        %v1437 = vpop.f32.mrf.mxu0
        %v1438 = vadd.f32 0.0, %v1437
        %v1439 = vpop.f32.mrf.mxu0
        %v1440 = vpop.f32.mrf.mxu0
        %v1441 = vadd.f32 0.0, %v1440
        %v1442 = vpop.f32.mrf.mxu0
        %1443 = vdwg.mxu0
        %vm1444 = vcmask 523264
        %v1445 = vsel %vm1444, %v763, -inf
        %1446 = vmax.xlane.f32.xlu0 %v1445
        %v1447 = vpop.xlane.xlu0 %1446
        %v1448 = vsel %vm1444, %v766, -inf
        %1449 = vmax.xlane.f32.xlu0 %v1448
        %v1450 = vpop.xlane.xlu0 %1449
        %v1451 = vsel %vm1444, %v771, -inf
        %1452 = vmax.xlane.f32.xlu0 %v1451
        %v1453 = vpop.xlane.xlu0 %1452
        %v1454 = vsel %vm1444, %v774, -inf
        %1455 = vmax.xlane.f32.xlu0 %v1454
        %v1456 = vpop.xlane.xlu0 %1455
        %v1457 = vsel %vm1444, %v779, -inf
        %1458 = vmax.xlane.f32.xlu0 %v1457
        %v1459 = vpop.xlane.xlu0 %1458
        %v1460 = vsel %vm1444, %v782, -inf
        %1461 = vmax.xlane.f32.xlu0 %v1460
        %v1462 = vpop.xlane.xlu0 %1461
        %v1463 = vsel %vm1444, %v787, -inf
        %1464 = vmax.xlane.f32.xlu0 %v1463
        %v1465 = vpop.xlane.xlu0 %1464
        %v1466 = vsel %vm1444, %v790, -inf
        %1467 = vmax.xlane.f32.xlu0 %v1466
        %v1468 = vpop.xlane.xlu0 %1467
        %v1469 = vsel %vm1444, %v856, -inf
        %1470 = vmax.xlane.f32.xlu0 %v1469
        %v1471 = vpop.xlane.xlu0 %1470
        %v1472 = vsel %vm1444, %v859, -inf
        %1473 = vmax.xlane.f32.xlu0 %v1472
        %v1474 = vpop.xlane.xlu0 %1473
        %v1475 = vsel %vm1444, %v864, -inf
        %1476 = vmax.xlane.f32.xlu0 %v1475
        %v1477 = vpop.xlane.xlu0 %1476
        %v1478 = vsel %vm1444, %v867, -inf
        %1479 = vmax.xlane.f32.xlu0 %v1478
        %v1480 = vpop.xlane.xlu0 %1479
        %v1481 = vsel %vm1444, %v872, -inf
        %1482 = vmax.xlane.f32.xlu0 %v1481
        %v1483 = vpop.xlane.xlu0 %1482
        %v1484 = vsel %vm1444, %v875, -inf
        %1485 = vmax.xlane.f32.xlu0 %v1484
        %v1486 = vpop.xlane.xlu0 %1485
        %v1487 = vsel %vm1444, %v880, -inf
        %1488 = vmax.xlane.f32.xlu0 %v1487
        %v1489 = vpop.xlane.xlu0 %1488
        %v1490 = vsel %vm1444, %v883, -inf
        %1491 = vmax.xlane.f32.xlu0 %v1490
        %v1492 = vpop.xlane.xlu0 %1491
        %v1493 = vsel %vm1444, %v949, -inf
        %1494 = vmax.xlane.f32.xlu0 %v1493
        %v1495 = vpop.xlane.xlu0 %1494
        %v1496 = vsel %vm1444, %v952, -inf
        %1497 = vmax.xlane.f32.xlu0 %v1496
        %v1498 = vpop.xlane.xlu0 %1497
        %v1499 = vsel %vm1444, %v957, -inf
        %1500 = vmax.xlane.f32.xlu0 %v1499
        %v1501 = vpop.xlane.xlu0 %1500
        %v1502 = vsel %vm1444, %v960, -inf
        %1503 = vmax.xlane.f32.xlu0 %v1502
        %v1504 = vpop.xlane.xlu0 %1503
        %v1505 = vsel %vm1444, %v965, -inf
        %1506 = vmax.xlane.f32.xlu0 %v1505
        %v1507 = vpop.xlane.xlu0 %1506
        %v1508 = vsel %vm1444, %v968, -inf
        %1509 = vmax.xlane.f32.xlu0 %v1508
        %v1510 = vpop.xlane.xlu0 %1509
        %v1511 = vsel %vm1444, %v973, -inf
        %1512 = vmax.xlane.f32.xlu0 %v1511
        %v1513 = vpop.xlane.xlu0 %1512
        %v1514 = vsel %vm1444, %v976, -inf
        %1515 = vmax.xlane.f32.xlu0 %v1514
        %v1516 = vpop.xlane.xlu0 %1515
        %v1517 = vsel %vm1444, %v1042, -inf
        %1518 = vmax.xlane.f32.xlu0 %v1517
        %v1519 = vpop.xlane.xlu0 %1518
        %v1520 = vsel %vm1444, %v1045, -inf
        %1521 = vmax.xlane.f32.xlu0 %v1520
        %v1522 = vpop.xlane.xlu0 %1521
        %v1523 = vsel %vm1444, %v1050, -inf
        %1524 = vmax.xlane.f32.xlu0 %v1523
        %v1525 = vpop.xlane.xlu0 %1524
        %v1526 = vsel %vm1444, %v1053, -inf
        %1527 = vmax.xlane.f32.xlu0 %v1526
        %v1528 = vpop.xlane.xlu0 %1527
        %v1529 = vsel %vm1444, %v1058, -inf
        %1530 = vmax.xlane.f32.xlu0 %v1529
        %v1531 = vpop.xlane.xlu0 %1530
        %v1532 = vsel %vm1444, %v1061, -inf
        %1533 = vmax.xlane.f32.xlu0 %v1532
        %v1534 = vpop.xlane.xlu0 %1533
        %v1535 = vsel %vm1444, %v1066, -inf
        %1536 = vmax.xlane.f32.xlu0 %v1535
        %v1537 = vpop.xlane.xlu0 %1536
        %v1538 = vsel %vm1444, %v1069, -inf
        %1539 = vmax.xlane.f32.xlu0 %v1538
        %v1540 = vpop.xlane.xlu0 %1539
        %v1541 = vsel %vm1444, %v1135, -inf
        %1542 = vmax.xlane.f32.xlu0 %v1541
        %v1543 = vpop.xlane.xlu0 %1542
        %v1544 = vsel %vm1444, %v1138, -inf
        %1545 = vmax.xlane.f32.xlu0 %v1544
        %v1546 = vpop.xlane.xlu0 %1545
        %v1547 = vsel %vm1444, %v1143, -inf
        %1548 = vmax.xlane.f32.xlu0 %v1547
        %v1549 = vpop.xlane.xlu0 %1548
        %v1550 = vsel %vm1444, %v1146, -inf
        %1551 = vmax.xlane.f32.xlu0 %v1550
        %v1552 = vpop.xlane.xlu0 %1551
        %v1553 = vsel %vm1444, %v1151, -inf
        %1554 = vmax.xlane.f32.xlu0 %v1553
        %v1555 = vpop.xlane.xlu0 %1554
        %v1556 = vsel %vm1444, %v1154, -inf
        %1557 = vmax.xlane.f32.xlu0 %v1556
        %v1558 = vpop.xlane.xlu0 %1557
        %v1559 = vsel %vm1444, %v1159, -inf
        %1560 = vmax.xlane.f32.xlu0 %v1559
        %v1561 = vpop.xlane.xlu0 %1560
        %v1562 = vsel %vm1444, %v1162, -inf
        %1563 = vmax.xlane.f32.xlu0 %v1562
        %v1564 = vpop.xlane.xlu0 %1563
        %v1565 = vsel %vm1444, %v1228, -inf
        %1566 = vmax.xlane.f32.xlu0 %v1565
        %v1567 = vpop.xlane.xlu0 %1566
        %v1568 = vsel %vm1444, %v1231, -inf
        %1569 = vmax.xlane.f32.xlu0 %v1568
        %v1570 = vpop.xlane.xlu0 %1569
        %v1571 = vsel %vm1444, %v1236, -inf
        %1572 = vmax.xlane.f32.xlu0 %v1571
        %v1573 = vpop.xlane.xlu0 %1572
        %v1574 = vsel %vm1444, %v1239, -inf
        %1575 = vmax.xlane.f32.xlu0 %v1574
        %v1576 = vpop.xlane.xlu0 %1575
        %v1577 = vsel %vm1444, %v1244, -inf
        %1578 = vmax.xlane.f32.xlu0 %v1577
        %v1579 = vpop.xlane.xlu0 %1578
        %v1580 = vsel %vm1444, %v1247, -inf
        %1581 = vmax.xlane.f32.xlu0 %v1580
        %v1582 = vpop.xlane.xlu0 %1581
        %v1583 = vsel %vm1444, %v1252, -inf
        %1584 = vmax.xlane.f32.xlu0 %v1583
        %v1585 = vpop.xlane.xlu0 %1584
        %v1586 = vsel %vm1444, %v1255, -inf
        %1587 = vmax.xlane.f32.xlu0 %v1586
        %v1588 = vpop.xlane.xlu0 %1587
        %v1589 = vsel %vm1444, %v1321, -inf
        %1590 = vmax.xlane.f32.xlu0 %v1589
        %v1591 = vpop.xlane.xlu0 %1590
        %v1592 = vsel %vm1444, %v1324, -inf
        %1593 = vmax.xlane.f32.xlu0 %v1592
        %v1594 = vpop.xlane.xlu0 %1593
        %v1595 = vsel %vm1444, %v1329, -inf
        %1596 = vmax.xlane.f32.xlu0 %v1595
        %v1597 = vpop.xlane.xlu0 %1596
        %v1598 = vsel %vm1444, %v1332, -inf
        %1599 = vmax.xlane.f32.xlu0 %v1598
        %v1600 = vpop.xlane.xlu0 %1599
        %v1601 = vsel %vm1444, %v1337, -inf
        %1602 = vmax.xlane.f32.xlu0 %v1601
        %v1603 = vpop.xlane.xlu0 %1602
        %v1604 = vsel %vm1444, %v1340, -inf
        %1605 = vmax.xlane.f32.xlu0 %v1604
        %v1606 = vpop.xlane.xlu0 %1605
        %v1607 = vsel %vm1444, %v1345, -inf
        %1608 = vmax.xlane.f32.xlu0 %v1607
        %v1609 = vpop.xlane.xlu0 %1608
        %v1610 = vsel %vm1444, %v1348, -inf
        %1611 = vmax.xlane.f32.xlu0 %v1610
        %v1612 = vpop.xlane.xlu0 %1611
        %v1613 = vsel %vm1444, %v1414, -inf
        %1614 = vmax.xlane.f32.xlu0 %v1613
        %v1615 = vpop.xlane.xlu0 %1614
        %v1616 = vsel %vm1444, %v1417, -inf
        %1617 = vmax.xlane.f32.xlu0 %v1616
        %v1618 = vpop.xlane.xlu0 %1617
        %v1619 = vsel %vm1444, %v1422, -inf
        %1620 = vmax.xlane.f32.xlu0 %v1619
        %v1621 = vpop.xlane.xlu0 %1620
        %v1622 = vsel %vm1444, %v1425, -inf
        %1623 = vmax.xlane.f32.xlu0 %v1622
        %v1624 = vpop.xlane.xlu0 %1623
        %v1625 = vsel %vm1444, %v1430, -inf
        %1626 = vmax.xlane.f32.xlu0 %v1625
        %v1627 = vpop.xlane.xlu0 %1626
        %v1628 = vsel %vm1444, %v1433, -inf
        %1629 = vmax.xlane.f32.xlu0 %v1628
        %v1630 = vpop.xlane.xlu0 %1629
        %v1631 = vsel %vm1444, %v1438, -inf
        %1632 = vmax.xlane.f32.xlu0 %v1631
        %v1633 = vpop.xlane.xlu0 %1632
        %v1634 = vsel %vm1444, %v1441, -inf
        %1635 = vmax.xlane.f32.xlu0 %v1634
        %v1636 = vpop.xlane.xlu0 %1635
        %v1637 = vsub.f32 %v763, %v1447
        %v1638 = vsub.f32 %v766, %v1450
        %v1639 = vsub.f32 %v771, %v1453
        %v1640 = vsub.f32 %v774, %v1456
        %v1641 = vsub.f32 %v779, %v1459
        %v1642 = vsub.f32 %v782, %v1462
        %v1643 = vsub.f32 %v787, %v1465
        %v1644 = vsub.f32 %v790, %v1468
        %v1645 = vsub.f32 %v856, %v1471
        %v1646 = vsub.f32 %v859, %v1474
        %v1647 = vsub.f32 %v864, %v1477
        %v1648 = vsub.f32 %v867, %v1480
        %v1649 = vsub.f32 %v872, %v1483
        %v1650 = vsub.f32 %v875, %v1486
        %v1651 = vsub.f32 %v880, %v1489
        %v1652 = vsub.f32 %v883, %v1492
        %v1653 = vsub.f32 %v949, %v1495
        %v1654 = vsub.f32 %v952, %v1498
        %v1655 = vsub.f32 %v957, %v1501
        %v1656 = vsub.f32 %v960, %v1504
        %v1657 = vsub.f32 %v965, %v1507
        %v1658 = vsub.f32 %v968, %v1510
        %v1659 = vsub.f32 %v973, %v1513
        %v1660 = vsub.f32 %v976, %v1516
        %v1661 = vsub.f32 %v1042, %v1519
        %v1662 = vsub.f32 %v1045, %v1522
        %v1663 = vsub.f32 %v1050, %v1525
        %v1664 = vsub.f32 %v1053, %v1528
        %v1665 = vsub.f32 %v1058, %v1531
        %v1666 = vsub.f32 %v1061, %v1534
        %v1667 = vsub.f32 %v1066, %v1537
        %v1668 = vsub.f32 %v1069, %v1540
        %v1669 = vsub.f32 %v1135, %v1543
        %v1670 = vsub.f32 %v1138, %v1546
        %v1671 = vsub.f32 %v1143, %v1549
        %v1672 = vsub.f32 %v1146, %v1552
        %v1673 = vsub.f32 %v1151, %v1555
        %v1674 = vsub.f32 %v1154, %v1558
        %v1675 = vsub.f32 %v1159, %v1561
        %v1676 = vsub.f32 %v1162, %v1564
        %v1677 = vsub.f32 %v1228, %v1567
        %v1678 = vsub.f32 %v1231, %v1570
        %v1679 = vsub.f32 %v1236, %v1573
        %v1680 = vsub.f32 %v1239, %v1576
        %v1681 = vsub.f32 %v1244, %v1579
        %v1682 = vsub.f32 %v1247, %v1582
        %v1683 = vsub.f32 %v1252, %v1585
        %v1684 = vsub.f32 %v1255, %v1588
        %v1685 = vsub.f32 %v1321, %v1591
        %v1686 = vsub.f32 %v1324, %v1594
        %v1687 = vsub.f32 %v1329, %v1597
        %v1688 = vsub.f32 %v1332, %v1600
        %v1689 = vsub.f32 %v1337, %v1603
        %v1690 = vsub.f32 %v1340, %v1606
        %v1691 = vsub.f32 %v1345, %v1609
        %v1692 = vsub.f32 %v1348, %v1612
        %v1693 = vsub.f32 %v1414, %v1615
        %v1694 = vsub.f32 %v1417, %v1618
        %v1695 = vsub.f32 %v1422, %v1621
        %v1696 = vsub.f32 %v1425, %v1624
        %v1697 = vsub.f32 %v1430, %v1627
        %v1698 = vsub.f32 %v1433, %v1630
        %v1699 = vsub.f32 %v1438, %v1633
        %v1700 = vsub.f32 %v1441, %v1636
        %v1701 = vmul.f32 %v1637, 1.442695
        %v1702 = vpow.pop %v1701
        %v1703 = vmul.f32 %v1638, 1.442695
        %v1704 = vpow.pop %v1703
        %v1705 = vmul.f32 %v1639, 1.442695
        %v1706 = vpow.pop %v1705
        %v1707 = vmul.f32 %v1640, 1.442695
        %v1708 = vpow.pop %v1707
        %v1709 = vmul.f32 %v1641, 1.442695
        %v1710 = vpow.pop %v1709
        %v1711 = vmul.f32 %v1642, 1.442695
        %v1712 = vpow.pop %v1711
        %v1713 = vmul.f32 %v1643, 1.442695
        %v1714 = vpow.pop %v1713
        %v1715 = vmul.f32 %v1644, 1.442695
        %v1716 = vpow.pop %v1715
        %v1717 = vmul.f32 %v1645, 1.442695
        %v1718 = vpow.pop %v1717
        %v1719 = vmul.f32 %v1646, 1.442695
        %v1720 = vpow.pop %v1719
        %v1721 = vmul.f32 %v1647, 1.442695
        %v1722 = vpow.pop %v1721
        %v1723 = vmul.f32 %v1648, 1.442695
        %v1724 = vpow.pop %v1723
        %v1725 = vmul.f32 %v1649, 1.442695
        %v1726 = vpow.pop %v1725
        %v1727 = vmul.f32 %v1650, 1.442695
        %v1728 = vpow.pop %v1727
        %v1729 = vmul.f32 %v1651, 1.442695
        %v1730 = vpow.pop %v1729
        %v1731 = vmul.f32 %v1652, 1.442695
        %v1732 = vpow.pop %v1731
        %v1733 = vmul.f32 %v1653, 1.442695
        %v1734 = vpow.pop %v1733
        %v1735 = vmul.f32 %v1654, 1.442695
        %v1736 = vpow.pop %v1735
        %v1737 = vmul.f32 %v1655, 1.442695
        %v1738 = vpow.pop %v1737
        %v1739 = vmul.f32 %v1656, 1.442695
        %v1740 = vpow.pop %v1739
        %v1741 = vmul.f32 %v1657, 1.442695
        %v1742 = vpow.pop %v1741
        %v1743 = vmul.f32 %v1658, 1.442695
        %v1744 = vpow.pop %v1743
        %v1745 = vmul.f32 %v1659, 1.442695
        %v1746 = vpow.pop %v1745
        %v1747 = vmul.f32 %v1660, 1.442695
        %v1748 = vpow.pop %v1747
        %v1749 = vmul.f32 %v1661, 1.442695
        %v1750 = vpow.pop %v1749
        %v1751 = vmul.f32 %v1662, 1.442695
        %v1752 = vpow.pop %v1751
        %v1753 = vmul.f32 %v1663, 1.442695
        %v1754 = vpow.pop %v1753
        %v1755 = vmul.f32 %v1664, 1.442695
        %v1756 = vpow.pop %v1755
        %v1757 = vmul.f32 %v1665, 1.442695
        %v1758 = vpow.pop %v1757
        %v1759 = vmul.f32 %v1666, 1.442695
        %v1760 = vpow.pop %v1759
        %v1761 = vmul.f32 %v1667, 1.442695
        %v1762 = vpow.pop %v1761
        %v1763 = vmul.f32 %v1668, 1.442695
        %v1764 = vpow.pop %v1763
        %v1765 = vmul.f32 %v1669, 1.442695
        %v1766 = vpow.pop %v1765
        %v1767 = vmul.f32 %v1670, 1.442695
        %v1768 = vpow.pop %v1767
        %v1769 = vmul.f32 %v1671, 1.442695
        %v1770 = vpow.pop %v1769
        %v1771 = vmul.f32 %v1672, 1.442695
        %v1772 = vpow.pop %v1771
        %v1773 = vmul.f32 %v1673, 1.442695
        %v1774 = vpow.pop %v1773
        %v1775 = vmul.f32 %v1674, 1.442695
        %v1776 = vpow.pop %v1775
        %v1777 = vmul.f32 %v1675, 1.442695
        %v1778 = vpow.pop %v1777
        %v1779 = vmul.f32 %v1676, 1.442695
        %v1780 = vpow.pop %v1779
        %v1781 = vmul.f32 %v1677, 1.442695
        %v1782 = vpow.pop %v1781
        %v1783 = vmul.f32 %v1678, 1.442695
        %v1784 = vpow.pop %v1783
        %v1785 = vmul.f32 %v1679, 1.442695
        %v1786 = vpow.pop %v1785
        %v1787 = vmul.f32 %v1680, 1.442695
        %v1788 = vpow.pop %v1787
        %v1789 = vmul.f32 %v1681, 1.442695
        %v1790 = vpow.pop %v1789
        %v1791 = vmul.f32 %v1682, 1.442695
        %v1792 = vpow.pop %v1791
        %v1793 = vmul.f32 %v1683, 1.442695
        %v1794 = vpow.pop %v1793
        %v1795 = vmul.f32 %v1684, 1.442695
        %v1796 = vpow.pop %v1795
        %v1797 = vmul.f32 %v1685, 1.442695
        %v1798 = vpow.pop %v1797
        %v1799 = vmul.f32 %v1686, 1.442695
        %v1800 = vpow.pop %v1799
        %v1801 = vmul.f32 %v1687, 1.442695
        %v1802 = vpow.pop %v1801
        %v1803 = vmul.f32 %v1688, 1.442695
        %v1804 = vpow.pop %v1803
        %v1805 = vmul.f32 %v1689, 1.442695
        %v1806 = vpow.pop %v1805
        %v1807 = vmul.f32 %v1690, 1.442695
        %v1808 = vpow.pop %v1807
        %v1809 = vmul.f32 %v1691, 1.442695
        %v1810 = vpow.pop %v1809
        %v1811 = vmul.f32 %v1692, 1.442695
        %v1812 = vpow.pop %v1811
        %v1813 = vmul.f32 %v1693, 1.442695
        %v1814 = vpow.pop %v1813
        %v1815 = vmul.f32 %v1694, 1.442695
        %v1816 = vpow.pop %v1815
        %v1817 = vmul.f32 %v1695, 1.442695
        %v1818 = vpow.pop %v1817
        %v1819 = vmul.f32 %v1696, 1.442695
        %v1820 = vpow.pop %v1819
        %v1821 = vmul.f32 %v1697, 1.442695
        %v1822 = vpow.pop %v1821
        %v1823 = vmul.f32 %v1698, 1.442695
        %v1824 = vpow.pop %v1823
        %v1825 = vmul.f32 %v1699, 1.442695
        %v1826 = vpow.pop %v1825
        %v1827 = vmul.f32 %v1700, 1.442695
        %v1828 = vpow.pop %v1827
        %v1829 = vsel %vm1444, %v1702, 0.0
        %1830 = vadd.xlane.f32.xlu0 %v1829
        %v1831 = vpop.xlane.xlu0 %1830
        %v1832 = vsel %vm1444, %v1704, 0.0
        %1833 = vadd.xlane.f32.xlu0 %v1832
        %v1834 = vpop.xlane.xlu0 %1833
        %v1835 = vsel %vm1444, %v1706, 0.0
        %1836 = vadd.xlane.f32.xlu0 %v1835
        %v1837 = vpop.xlane.xlu0 %1836
        %v1838 = vsel %vm1444, %v1708, 0.0
        %1839 = vadd.xlane.f32.xlu0 %v1838
        %v1840 = vpop.xlane.xlu0 %1839
        %v1841 = vsel %vm1444, %v1710, 0.0
        %1842 = vadd.xlane.f32.xlu0 %v1841
        %v1843 = vpop.xlane.xlu0 %1842
        %v1844 = vsel %vm1444, %v1712, 0.0
        %1845 = vadd.xlane.f32.xlu0 %v1844
        %v1846 = vpop.xlane.xlu0 %1845
        %v1847 = vsel %vm1444, %v1714, 0.0
        %1848 = vadd.xlane.f32.xlu0 %v1847
        %v1849 = vpop.xlane.xlu0 %1848
        %v1850 = vsel %vm1444, %v1716, 0.0
        %1851 = vadd.xlane.f32.xlu0 %v1850
        %v1852 = vpop.xlane.xlu0 %1851
        %v1853 = vsel %vm1444, %v1718, 0.0
        %1854 = vadd.xlane.f32.xlu0 %v1853
        %v1855 = vpop.xlane.xlu0 %1854
        %v1856 = vsel %vm1444, %v1720, 0.0
        %1857 = vadd.xlane.f32.xlu0 %v1856
        %v1858 = vpop.xlane.xlu0 %1857
        %v1859 = vsel %vm1444, %v1722, 0.0
        %1860 = vadd.xlane.f32.xlu0 %v1859
        %v1861 = vpop.xlane.xlu0 %1860
        %v1862 = vsel %vm1444, %v1724, 0.0
        %1863 = vadd.xlane.f32.xlu0 %v1862
        %v1864 = vpop.xlane.xlu0 %1863
        %v1865 = vsel %vm1444, %v1726, 0.0
        %1866 = vadd.xlane.f32.xlu0 %v1865
        %v1867 = vpop.xlane.xlu0 %1866
        %v1868 = vsel %vm1444, %v1728, 0.0
        %1869 = vadd.xlane.f32.xlu0 %v1868
        %v1870 = vpop.xlane.xlu0 %1869
        %v1871 = vsel %vm1444, %v1730, 0.0
        %1872 = vadd.xlane.f32.xlu0 %v1871
        %v1873 = vpop.xlane.xlu0 %1872
        %v1874 = vsel %vm1444, %v1732, 0.0
        %1875 = vadd.xlane.f32.xlu0 %v1874
        %v1876 = vpop.xlane.xlu0 %1875
        %v1877 = vsel %vm1444, %v1734, 0.0
        %1878 = vadd.xlane.f32.xlu0 %v1877
        %v1879 = vpop.xlane.xlu0 %1878
        %v1880 = vsel %vm1444, %v1736, 0.0
        %1881 = vadd.xlane.f32.xlu0 %v1880
        %v1882 = vpop.xlane.xlu0 %1881
        %v1883 = vsel %vm1444, %v1738, 0.0
        %1884 = vadd.xlane.f32.xlu0 %v1883
        %v1885 = vpop.xlane.xlu0 %1884
        %v1886 = vsel %vm1444, %v1740, 0.0
        %1887 = vadd.xlane.f32.xlu0 %v1886
        %v1888 = vpop.xlane.xlu0 %1887
        %v1889 = vsel %vm1444, %v1742, 0.0
        %1890 = vadd.xlane.f32.xlu0 %v1889
        %v1891 = vpop.xlane.xlu0 %1890
        %v1892 = vsel %vm1444, %v1744, 0.0
        %1893 = vadd.xlane.f32.xlu0 %v1892
        %v1894 = vpop.xlane.xlu0 %1893
        %v1895 = vsel %vm1444, %v1746, 0.0
        %1896 = vadd.xlane.f32.xlu0 %v1895
        %v1897 = vpop.xlane.xlu0 %1896
        %v1898 = vsel %vm1444, %v1748, 0.0
        %1899 = vadd.xlane.f32.xlu0 %v1898
        %v1900 = vpop.xlane.xlu0 %1899
        %v1901 = vsel %vm1444, %v1750, 0.0
        %1902 = vadd.xlane.f32.xlu0 %v1901
        %v1903 = vpop.xlane.xlu0 %1902
        %v1904 = vsel %vm1444, %v1752, 0.0
        %1905 = vadd.xlane.f32.xlu0 %v1904
        %v1906 = vpop.xlane.xlu0 %1905
        %v1907 = vsel %vm1444, %v1754, 0.0
        %1908 = vadd.xlane.f32.xlu0 %v1907
        %v1909 = vpop.xlane.xlu0 %1908
        %v1910 = vsel %vm1444, %v1756, 0.0
        %1911 = vadd.xlane.f32.xlu0 %v1910
        %v1912 = vpop.xlane.xlu0 %1911
        %v1913 = vsel %vm1444, %v1758, 0.0
        %1914 = vadd.xlane.f32.xlu0 %v1913
        %v1915 = vpop.xlane.xlu0 %1914
        %v1916 = vsel %vm1444, %v1760, 0.0
        %1917 = vadd.xlane.f32.xlu0 %v1916
        %v1918 = vpop.xlane.xlu0 %1917
        %v1919 = vsel %vm1444, %v1762, 0.0
        %1920 = vadd.xlane.f32.xlu0 %v1919
        %v1921 = vpop.xlane.xlu0 %1920
        %v1922 = vsel %vm1444, %v1764, 0.0
        %1923 = vadd.xlane.f32.xlu0 %v1922
        %v1924 = vpop.xlane.xlu0 %1923
        %v1925 = vsel %vm1444, %v1766, 0.0
        %1926 = vadd.xlane.f32.xlu0 %v1925
        %v1927 = vpop.xlane.xlu0 %1926
        %v1928 = vsel %vm1444, %v1768, 0.0
        %1929 = vadd.xlane.f32.xlu0 %v1928
        %v1930 = vpop.xlane.xlu0 %1929
        %v1931 = vsel %vm1444, %v1770, 0.0
        %1932 = vadd.xlane.f32.xlu0 %v1931
        %v1933 = vpop.xlane.xlu0 %1932
        %v1934 = vsel %vm1444, %v1772, 0.0
        %1935 = vadd.xlane.f32.xlu0 %v1934
        %v1936 = vpop.xlane.xlu0 %1935
        %v1937 = vsel %vm1444, %v1774, 0.0
        %1938 = vadd.xlane.f32.xlu0 %v1937
        %v1939 = vpop.xlane.xlu0 %1938
        %v1940 = vsel %vm1444, %v1776, 0.0
        %1941 = vadd.xlane.f32.xlu0 %v1940
        %v1942 = vpop.xlane.xlu0 %1941
        %v1943 = vsel %vm1444, %v1778, 0.0
        %1944 = vadd.xlane.f32.xlu0 %v1943
        %v1945 = vpop.xlane.xlu0 %1944
        %v1946 = vsel %vm1444, %v1780, 0.0
        %1947 = vadd.xlane.f32.xlu0 %v1946
        %v1948 = vpop.xlane.xlu0 %1947
        %v1949 = vsel %vm1444, %v1782, 0.0
        %1950 = vadd.xlane.f32.xlu0 %v1949
        %v1951 = vpop.xlane.xlu0 %1950
        %v1952 = vsel %vm1444, %v1784, 0.0
        %1953 = vadd.xlane.f32.xlu0 %v1952
        %v1954 = vpop.xlane.xlu0 %1953
        %v1955 = vsel %vm1444, %v1786, 0.0
        %1956 = vadd.xlane.f32.xlu0 %v1955
        %v1957 = vpop.xlane.xlu0 %1956
        %v1958 = vsel %vm1444, %v1788, 0.0
        %1959 = vadd.xlane.f32.xlu0 %v1958
        %v1960 = vpop.xlane.xlu0 %1959
        %v1961 = vsel %vm1444, %v1790, 0.0
        %1962 = vadd.xlane.f32.xlu0 %v1961
        %v1963 = vpop.xlane.xlu0 %1962
        %v1964 = vsel %vm1444, %v1792, 0.0
        %1965 = vadd.xlane.f32.xlu0 %v1964
        %v1966 = vpop.xlane.xlu0 %1965
        %v1967 = vsel %vm1444, %v1794, 0.0
        %1968 = vadd.xlane.f32.xlu0 %v1967
        %v1969 = vpop.xlane.xlu0 %1968
        %v1970 = vsel %vm1444, %v1796, 0.0
        %1971 = vadd.xlane.f32.xlu0 %v1970
        %v1972 = vpop.xlane.xlu0 %1971
        %v1973 = vsel %vm1444, %v1798, 0.0
        %1974 = vadd.xlane.f32.xlu0 %v1973
        %v1975 = vpop.xlane.xlu0 %1974
        %v1976 = vsel %vm1444, %v1800, 0.0
        %1977 = vadd.xlane.f32.xlu0 %v1976
        %v1978 = vpop.xlane.xlu0 %1977
        %v1979 = vsel %vm1444, %v1802, 0.0
        %1980 = vadd.xlane.f32.xlu0 %v1979
        %v1981 = vpop.xlane.xlu0 %1980
        %v1982 = vsel %vm1444, %v1804, 0.0
        %1983 = vadd.xlane.f32.xlu0 %v1982
        %v1984 = vpop.xlane.xlu0 %1983
        %v1985 = vsel %vm1444, %v1806, 0.0
        %1986 = vadd.xlane.f32.xlu0 %v1985
        %v1987 = vpop.xlane.xlu0 %1986
        %v1988 = vsel %vm1444, %v1808, 0.0
        %1989 = vadd.xlane.f32.xlu0 %v1988
        %v1990 = vpop.xlane.xlu0 %1989
        %v1991 = vsel %vm1444, %v1810, 0.0
        %1992 = vadd.xlane.f32.xlu0 %v1991
        %v1993 = vpop.xlane.xlu0 %1992
        %v1994 = vsel %vm1444, %v1812, 0.0
        %1995 = vadd.xlane.f32.xlu0 %v1994
        %v1996 = vpop.xlane.xlu0 %1995
        %v1997 = vsel %vm1444, %v1814, 0.0
        %1998 = vadd.xlane.f32.xlu0 %v1997
        %v1999 = vpop.xlane.xlu0 %1998
        %v2000 = vsel %vm1444, %v1816, 0.0
        %2001 = vadd.xlane.f32.xlu0 %v2000
        %v2002 = vpop.xlane.xlu0 %2001
        %v2003 = vsel %vm1444, %v1818, 0.0
        %2004 = vadd.xlane.f32.xlu0 %v2003
        %v2005 = vpop.xlane.xlu0 %2004
        %v2006 = vsel %vm1444, %v1820, 0.0
        %2007 = vadd.xlane.f32.xlu0 %v2006
        %v2008 = vpop.xlane.xlu0 %2007
        %v2009 = vsel %vm1444, %v1822, 0.0
        %2010 = vadd.xlane.f32.xlu0 %v2009
        %v2011 = vpop.xlane.xlu0 %2010
        %v2012 = vsel %vm1444, %v1824, 0.0
        %2013 = vadd.xlane.f32.xlu0 %v2012
        %v2014 = vpop.xlane.xlu0 %2013
        %v2015 = vsel %vm1444, %v1826, 0.0
        %2016 = vadd.xlane.f32.xlu0 %v2015
        %v2017 = vpop.xlane.xlu0 %2016
        %v2018 = vsel %vm1444, %v1828, 0.0
        %2019 = vadd.xlane.f32.xlu0 %v2018
        %v2020 = vpop.xlane.xlu0 %2019
        %v2021 = vrcp.pop %v1831
        %v2022 = vrcp.pop %v1834
        %v2023 = vrcp.pop %v1837
        %v2024 = vrcp.pop %v1840
        %v2025 = vrcp.pop %v1843
        %v2026 = vrcp.pop %v1846
        %v2027 = vrcp.pop %v1849
        %v2028 = vrcp.pop %v1852
        %v2029 = vrcp.pop %v1855
        %v2030 = vrcp.pop %v1858
        %v2031 = vrcp.pop %v1861
        %v2032 = vrcp.pop %v1864
        %v2033 = vrcp.pop %v1867
        %v2034 = vrcp.pop %v1870
        %v2035 = vrcp.pop %v1873
        %v2036 = vrcp.pop %v1876
        %v2037 = vrcp.pop %v1879
        %v2038 = vrcp.pop %v1882
        %v2039 = vrcp.pop %v1885
        %v2040 = vrcp.pop %v1888
        %v2041 = vrcp.pop %v1891
        %v2042 = vrcp.pop %v1894
        %v2043 = vrcp.pop %v1897
        %v2044 = vrcp.pop %v1900
        %v2045 = vrcp.pop %v1903
        %v2046 = vrcp.pop %v1906
        %v2047 = vrcp.pop %v1909
        %v2048 = vrcp.pop %v1912
        %v2049 = vrcp.pop %v1915
        %v2050 = vrcp.pop %v1918
        %v2051 = vrcp.pop %v1921
        %v2052 = vrcp.pop %v1924
        %v2053 = vrcp.pop %v1927
        %v2054 = vrcp.pop %v1930
        %v2055 = vrcp.pop %v1933
        %v2056 = vrcp.pop %v1936
        %v2057 = vrcp.pop %v1939
        %v2058 = vrcp.pop %v1942
        %v2059 = vrcp.pop %v1945
        %v2060 = vrcp.pop %v1948
        %v2061 = vrcp.pop %v1951
        %v2062 = vrcp.pop %v1954
        %v2063 = vrcp.pop %v1957
        %v2064 = vrcp.pop %v1960
        %v2065 = vrcp.pop %v1963
        %v2066 = vrcp.pop %v1966
        %v2067 = vrcp.pop %v1969
        %v2068 = vrcp.pop %v1972
        %v2069 = vrcp.pop %v1975
        %v2070 = vrcp.pop %v1978
        %v2071 = vrcp.pop %v1981
        %v2072 = vrcp.pop %v1984
        %v2073 = vrcp.pop %v1987
        %v2074 = vrcp.pop %v1990
        %v2075 = vrcp.pop %v1993
        %v2076 = vrcp.pop %v1996
        %v2077 = vrcp.pop %v1999
        %v2078 = vrcp.pop %v2002
        %v2079 = vrcp.pop %v2005
        %v2080 = vrcp.pop %v2008
        %v2081 = vrcp.pop %v2011
        %v2082 = vrcp.pop %v2014
        %v2083 = vrcp.pop %v2017
        %v2084 = vrcp.pop %v2020
        %v2085 = vmul.f32 %v1702, %v2021
        %v2086 = vmul.f32 %v1704, %v2022
        %v2087 = vmul.f32 %v1706, %v2023
        %v2088 = vmul.f32 %v1708, %v2024
        %v2089 = vmul.f32 %v1710, %v2025
        %v2090 = vmul.f32 %v1712, %v2026
        %v2091 = vmul.f32 %v1714, %v2027
        %v2092 = vmul.f32 %v1716, %v2028
        %v2093 = vmul.f32 %v1718, %v2029
        %v2094 = vmul.f32 %v1720, %v2030
        %v2095 = vmul.f32 %v1722, %v2031
        %v2096 = vmul.f32 %v1724, %v2032
        %v2097 = vmul.f32 %v1726, %v2033
        %v2098 = vmul.f32 %v1728, %v2034
        %v2099 = vmul.f32 %v1730, %v2035
        %v2100 = vmul.f32 %v1732, %v2036
        %v2101 = vmul.f32 %v1734, %v2037
        %v2102 = vmul.f32 %v1736, %v2038
        %v2103 = vmul.f32 %v1738, %v2039
        %v2104 = vmul.f32 %v1740, %v2040
        %v2105 = vmul.f32 %v1742, %v2041
        %v2106 = vmul.f32 %v1744, %v2042
        %v2107 = vmul.f32 %v1746, %v2043
        %v2108 = vmul.f32 %v1748, %v2044
        %v2109 = vmul.f32 %v1750, %v2045
        %v2110 = vmul.f32 %v1752, %v2046
        %v2111 = vmul.f32 %v1754, %v2047
        %v2112 = vmul.f32 %v1756, %v2048
        %v2113 = vmul.f32 %v1758, %v2049
        %v2114 = vmul.f32 %v1760, %v2050
        %v2115 = vmul.f32 %v1762, %v2051
        %v2116 = vmul.f32 %v1764, %v2052
        %v2117 = vmul.f32 %v1766, %v2053
        %v2118 = vmul.f32 %v1768, %v2054
        %v2119 = vmul.f32 %v1770, %v2055
        %v2120 = vmul.f32 %v1772, %v2056
        %v2121 = vmul.f32 %v1774, %v2057
        %v2122 = vmul.f32 %v1776, %v2058
        %v2123 = vmul.f32 %v1778, %v2059
        %v2124 = vmul.f32 %v1780, %v2060
        %v2125 = vmul.f32 %v1782, %v2061
        %v2126 = vmul.f32 %v1784, %v2062
        %v2127 = vmul.f32 %v1786, %v2063
        %v2128 = vmul.f32 %v1788, %v2064
        %v2129 = vmul.f32 %v1790, %v2065
        %v2130 = vmul.f32 %v1792, %v2066
        %v2131 = vmul.f32 %v1794, %v2067
        %v2132 = vmul.f32 %v1796, %v2068
        %v2133 = vmul.f32 %v1798, %v2069
        %v2134 = vmul.f32 %v1800, %v2070
        %v2135 = vmul.f32 %v1802, %v2071
        %v2136 = vmul.f32 %v1804, %v2072
        %v2137 = vmul.f32 %v1806, %v2073
        %v2138 = vmul.f32 %v1808, %v2074
        %v2139 = vmul.f32 %v1810, %v2075
        %v2140 = vmul.f32 %v1812, %v2076
        %v2141 = vmul.f32 %v1814, %v2077
        %v2142 = vmul.f32 %v1816, %v2078
        %v2143 = vmul.f32 %v1818, %v2079
        %v2144 = vmul.f32 %v1820, %v2080
        %v2145 = vmul.f32 %v1822, %v2081
        %v2146 = vmul.f32 %v1824, %v2082
        %v2147 = vmul.f32 %v1826, %v2083
        %v2148 = vmul.f32 %v1828, %v2084
        %v2149 = vpack.c.bf16 %v2086, %v2085
        %v2150 = vpack.c.bf16 %v2088, %v2087
        %v2151 = vpack.c.bf16 %v2090, %v2089
        %v2152 = vpack.c.bf16 %v2092, %v2091
        %v2153 = vpack.c.bf16 %v2094, %v2093
        %v2154 = vpack.c.bf16 %v2096, %v2095
        %v2155 = vpack.c.bf16 %v2098, %v2097
        %v2156 = vpack.c.bf16 %v2100, %v2099
        %v2157 = vpack.c.bf16 %v2102, %v2101
        %v2158 = vpack.c.bf16 %v2104, %v2103
        %v2159 = vpack.c.bf16 %v2106, %v2105
        %v2160 = vpack.c.bf16 %v2108, %v2107
        %v2161 = vpack.c.bf16 %v2110, %v2109
        %v2162 = vpack.c.bf16 %v2112, %v2111
        %v2163 = vpack.c.bf16 %v2114, %v2113
        %v2164 = vpack.c.bf16 %v2116, %v2115
        %v2165 = vpack.c.bf16 %v2118, %v2117
        %v2166 = vpack.c.bf16 %v2120, %v2119
        %v2167 = vpack.c.bf16 %v2122, %v2121
        %v2168 = vpack.c.bf16 %v2124, %v2123
        %v2169 = vpack.c.bf16 %v2126, %v2125
        %v2170 = vpack.c.bf16 %v2128, %v2127
        %v2171 = vpack.c.bf16 %v2130, %v2129
        %v2172 = vpack.c.bf16 %v2132, %v2131
        %v2173 = vpack.c.bf16 %v2134, %v2133
        %v2174 = vpack.c.bf16 %v2136, %v2135
        %v2175 = vpack.c.bf16 %v2138, %v2137
        %v2176 = vpack.c.bf16 %v2140, %v2139
        %v2177 = vpack.c.bf16 %v2142, %v2141
        %v2178 = vpack.c.bf16 %v2144, %v2143
        %v2179 = vpack.c.bf16 %v2146, %v2145
        %v2180 = vpack.c.bf16 %v2148, %v2147
        %v2182 = vsel %vm1444, %v691, 0
        %v2185 = vsel %vm1444, %v2149, 0
        %v2188 = vsel %vm1444, %v2150, 0
        %v2191 = vsel %vm1444, %v2151, 0
        %v2194 = vsel %vm1444, %v2152, 0
        %2196 = vmatprep.subr.bf16.mxu0 0
        %2197 = vmatpush1.bf16.xpose.msra.mxu0 0
        %2198 = vmatprep.subr.bf16.mxu0 0
        %2199 = vmatpush1.bf16.xpose.msra.mxu0 0
        %2200 = vmatprep.subr.bf16.mxu0 0
        %2201 = vmatpush1.bf16.xpose.msra.mxu0 0
        %2202 = vmatprep.subr.bf16.mxu0 0
        %2203 = vmatpush1.bf16.xpose.msra.mxu0 0
        %2204 = vmatprep.subr.bf16.mxu0 0
        %2205 = vmatpush1.bf16.xpose.msra.mxu0 %v2194
        %2206 = vmatprep.subr.bf16.mxu0 0
        %2207 = vmatpush1.bf16.xpose.msra.mxu0 %v2191
        %2208 = vmatprep.subr.bf16.mxu0 0
        %2209 = vmatpush1.bf16.xpose.msra.mxu0 %v2188
        %2210 = vmatprep.subr.bf16.mxu0 0
        %2211 = vmatpush1.bf16.xpose.msra.mxu0 %v2185
        %2212 = vmatprep.subr.bf16.mxu0 0
        %2213 = vmatpush2.bf16.xpose.msra.mxu0 0
        %2214 = vmatprep.subr.bf16.mxu0 0
        %2215 = vmatpush2.bf16.xpose.msra.mxu0 0
        %2216 = vmatprep.subr.bf16.mxu0 0
        %2217 = vmatpush2.bf16.xpose.msra.mxu0 0
        %2218 = vmatprep.subr.bf16.mxu0 0
        %2219 = vmatpush2.bf16.xpose.msra.mxu0 0
        %2220 = vmatprep.subr.bf16.mxu0 0
        %2221 = vmatpush2.bf16.xpose.msra.mxu0 0
        %2222 = vmatprep.subr.bf16.mxu0 0
        %2223 = vmatpush2.bf16.xpose.msra.mxu0 0
        %2224 = vmatprep.subr.bf16.mxu0 0
        %2225 = vmatpush2.bf16.xpose.msra.mxu0 0
        %2226 = vmatprep.subr.bf16.mxu0 0
        %2227 = vmatpush2.bf16.xpose.msra.mxu0 0
        %2228 = vmatprep.mubr.bf16.mxu0 0
        %2229 = vmatmul.mubr.bf16.gmra.mxu0 %v2182
        %v2230 = vpop.f32.mrf.mxu0
        %v2231 = vadd.f32 0.0, %v2230
        %v2232 = vpop.f32.mrf.mxu0
        %v2233 = vpop.f32.mrf.mxu0
        %v2234 = vadd.f32 0.0, %v2233
        %v2235 = vpop.f32.mrf.mxu0
        %2236 = vdwg.mxu0
        %v2238 = vsel %vm1444, %v692, 0
        %v2241 = vsel %vm1444, %v2153, 0
        %v2244 = vsel %vm1444, %v2154, 0
        %v2247 = vsel %vm1444, %v2155, 0
        %v2250 = vsel %vm1444, %v2156, 0
        %2252 = vmatprep.subr.bf16.mxu0 0
        %2253 = vmatpush1.bf16.xpose.msra.mxu0 0
        %2254 = vmatprep.subr.bf16.mxu0 0
        %2255 = vmatpush1.bf16.xpose.msra.mxu0 0
        %2256 = vmatprep.subr.bf16.mxu0 0
        %2257 = vmatpush1.bf16.xpose.msra.mxu0 0
        %2258 = vmatprep.subr.bf16.mxu0 0
        %2259 = vmatpush1.bf16.xpose.msra.mxu0 0
        %2260 = vmatprep.subr.bf16.mxu0 0
        %2261 = vmatpush1.bf16.xpose.msra.mxu0 %v2250
        %2262 = vmatprep.subr.bf16.mxu0 0
        %2263 = vmatpush1.bf16.xpose.msra.mxu0 %v2247
        %2264 = vmatprep.subr.bf16.mxu0 0
        %2265 = vmatpush1.bf16.xpose.msra.mxu0 %v2244
        %2266 = vmatprep.subr.bf16.mxu0 0
        %2267 = vmatpush1.bf16.xpose.msra.mxu0 %v2241
        %2268 = vmatprep.subr.bf16.mxu0 0
        %2269 = vmatpush2.bf16.xpose.msra.mxu0 0
        %2270 = vmatprep.subr.bf16.mxu0 0
        %2271 = vmatpush2.bf16.xpose.msra.mxu0 0
        %2272 = vmatprep.subr.bf16.mxu0 0
        %2273 = vmatpush2.bf16.xpose.msra.mxu0 0
        %2274 = vmatprep.subr.bf16.mxu0 0
        %2275 = vmatpush2.bf16.xpose.msra.mxu0 0
        %2276 = vmatprep.subr.bf16.mxu0 0
        %2277 = vmatpush2.bf16.xpose.msra.mxu0 0
        %2278 = vmatprep.subr.bf16.mxu0 0
        %2279 = vmatpush2.bf16.xpose.msra.mxu0 0
        %2280 = vmatprep.subr.bf16.mxu0 0
        %2281 = vmatpush2.bf16.xpose.msra.mxu0 0
        %2282 = vmatprep.subr.bf16.mxu0 0
        %2283 = vmatpush2.bf16.xpose.msra.mxu0 0
        %2284 = vmatprep.mubr.bf16.mxu0 0
        %2285 = vmatmul.mubr.bf16.gmra.mxu0 %v2238
        %v2286 = vpop.f32.mrf.mxu0
        %v2287 = vadd.f32 0.0, %v2286
        %v2288 = vpop.f32.mrf.mxu0
        %v2289 = vpop.f32.mrf.mxu0
        %v2290 = vadd.f32 0.0, %v2289
        %v2291 = vpop.f32.mrf.mxu0
        %2292 = vdwg.mxu0
        %v2294 = vsel %vm1444, %v693, 0
        %v2297 = vsel %vm1444, %v2157, 0
        %v2300 = vsel %vm1444, %v2158, 0
        %v2303 = vsel %vm1444, %v2159, 0
        %v2306 = vsel %vm1444, %v2160, 0
        %2308 = vmatprep.subr.bf16.mxu0 0
        %2309 = vmatpush1.bf16.xpose.msra.mxu0 0
        %2310 = vmatprep.subr.bf16.mxu0 0
        %2311 = vmatpush1.bf16.xpose.msra.mxu0 0
        %2312 = vmatprep.subr.bf16.mxu0 0
        %2313 = vmatpush1.bf16.xpose.msra.mxu0 0
        %2314 = vmatprep.subr.bf16.mxu0 0
        %2315 = vmatpush1.bf16.xpose.msra.mxu0 0
        %2316 = vmatprep.subr.bf16.mxu0 0
        %2317 = vmatpush1.bf16.xpose.msra.mxu0 %v2306
        %2318 = vmatprep.subr.bf16.mxu0 0
        %2319 = vmatpush1.bf16.xpose.msra.mxu0 %v2303
        %2320 = vmatprep.subr.bf16.mxu0 0
        %2321 = vmatpush1.bf16.xpose.msra.mxu0 %v2300
        %2322 = vmatprep.subr.bf16.mxu0 0
        %2323 = vmatpush1.bf16.xpose.msra.mxu0 %v2297
        %2324 = vmatprep.subr.bf16.mxu0 0
        %2325 = vmatpush2.bf16.xpose.msra.mxu0 0
        %2326 = vmatprep.subr.bf16.mxu0 0
        %2327 = vmatpush2.bf16.xpose.msra.mxu0 0
        %2328 = vmatprep.subr.bf16.mxu0 0
        %2329 = vmatpush2.bf16.xpose.msra.mxu0 0
        %2330 = vmatprep.subr.bf16.mxu0 0
        %2331 = vmatpush2.bf16.xpose.msra.mxu0 0
        %2332 = vmatprep.subr.bf16.mxu0 0
        %2333 = vmatpush2.bf16.xpose.msra.mxu0 0
        %2334 = vmatprep.subr.bf16.mxu0 0
        %2335 = vmatpush2.bf16.xpose.msra.mxu0 0
        %2336 = vmatprep.subr.bf16.mxu0 0
        %2337 = vmatpush2.bf16.xpose.msra.mxu0 0
        %2338 = vmatprep.subr.bf16.mxu0 0
        %2339 = vmatpush2.bf16.xpose.msra.mxu0 0
        %2340 = vmatprep.mubr.bf16.mxu0 0
        %2341 = vmatmul.mubr.bf16.gmra.mxu0 %v2294
        %v2342 = vpop.f32.mrf.mxu0
        %v2343 = vadd.f32 0.0, %v2342
        %v2344 = vpop.f32.mrf.mxu0
        %v2345 = vpop.f32.mrf.mxu0
        %v2346 = vadd.f32 0.0, %v2345
        %v2347 = vpop.f32.mrf.mxu0
        %2348 = vdwg.mxu0
        %v2350 = vsel %vm1444, %v694, 0
        %v2353 = vsel %vm1444, %v2161, 0
        %v2356 = vsel %vm1444, %v2162, 0
        %v2359 = vsel %vm1444, %v2163, 0
        %v2362 = vsel %vm1444, %v2164, 0
        %2364 = vmatprep.subr.bf16.mxu0 0
        %2365 = vmatpush1.bf16.xpose.msra.mxu0 0
        %2366 = vmatprep.subr.bf16.mxu0 0
        %2367 = vmatpush1.bf16.xpose.msra.mxu0 0
        %2368 = vmatprep.subr.bf16.mxu0 0
        %2369 = vmatpush1.bf16.xpose.msra.mxu0 0
        %2370 = vmatprep.subr.bf16.mxu0 0
        %2371 = vmatpush1.bf16.xpose.msra.mxu0 0
        %2372 = vmatprep.subr.bf16.mxu0 0
        %2373 = vmatpush1.bf16.xpose.msra.mxu0 %v2362
        %2374 = vmatprep.subr.bf16.mxu0 0
        %2375 = vmatpush1.bf16.xpose.msra.mxu0 %v2359
        %2376 = vmatprep.subr.bf16.mxu0 0
        %2377 = vmatpush1.bf16.xpose.msra.mxu0 %v2356
        %2378 = vmatprep.subr.bf16.mxu0 0
        %2379 = vmatpush1.bf16.xpose.msra.mxu0 %v2353
        %2380 = vmatprep.subr.bf16.mxu0 0
        %2381 = vmatpush2.bf16.xpose.msra.mxu0 0
        %2382 = vmatprep.subr.bf16.mxu0 0
        %2383 = vmatpush2.bf16.xpose.msra.mxu0 0
        %2384 = vmatprep.subr.bf16.mxu0 0
        %2385 = vmatpush2.bf16.xpose.msra.mxu0 0
        %2386 = vmatprep.subr.bf16.mxu0 0
        %2387 = vmatpush2.bf16.xpose.msra.mxu0 0
        %2388 = vmatprep.subr.bf16.mxu0 0
        %2389 = vmatpush2.bf16.xpose.msra.mxu0 0
        %2390 = vmatprep.subr.bf16.mxu0 0
        %2391 = vmatpush2.bf16.xpose.msra.mxu0 0
        %2392 = vmatprep.subr.bf16.mxu0 0
        %2393 = vmatpush2.bf16.xpose.msra.mxu0 0
        %2394 = vmatprep.subr.bf16.mxu0 0
        %2395 = vmatpush2.bf16.xpose.msra.mxu0 0
        %2396 = vmatprep.mubr.bf16.mxu0 0
        %2397 = vmatmul.mubr.bf16.gmra.mxu0 %v2350
        %v2398 = vpop.f32.mrf.mxu0
        %v2399 = vadd.f32 0.0, %v2398
        %v2400 = vpop.f32.mrf.mxu0
        %v2401 = vpop.f32.mrf.mxu0
        %v2402 = vadd.f32 0.0, %v2401
        %v2403 = vpop.f32.mrf.mxu0
        %2404 = vdwg.mxu0
        %v2406 = vsel %vm1444, %v695, 0
        %v2409 = vsel %vm1444, %v2165, 0
        %v2412 = vsel %vm1444, %v2166, 0
        %v2415 = vsel %vm1444, %v2167, 0
        %v2418 = vsel %vm1444, %v2168, 0
        %2420 = vmatprep.subr.bf16.mxu0 0
        %2421 = vmatpush1.bf16.xpose.msra.mxu0 0
        %2422 = vmatprep.subr.bf16.mxu0 0
        %2423 = vmatpush1.bf16.xpose.msra.mxu0 0
        %2424 = vmatprep.subr.bf16.mxu0 0
        %2425 = vmatpush1.bf16.xpose.msra.mxu0 0
        %2426 = vmatprep.subr.bf16.mxu0 0
        %2427 = vmatpush1.bf16.xpose.msra.mxu0 0
        %2428 = vmatprep.subr.bf16.mxu0 0
        %2429 = vmatpush1.bf16.xpose.msra.mxu0 %v2418
        %2430 = vmatprep.subr.bf16.mxu0 0
        %2431 = vmatpush1.bf16.xpose.msra.mxu0 %v2415
        %2432 = vmatprep.subr.bf16.mxu0 0
        %2433 = vmatpush1.bf16.xpose.msra.mxu0 %v2412
        %2434 = vmatprep.subr.bf16.mxu0 0
        %2435 = vmatpush1.bf16.xpose.msra.mxu0 %v2409
        %2436 = vmatprep.subr.bf16.mxu0 0
        %2437 = vmatpush2.bf16.xpose.msra.mxu0 0
        %2438 = vmatprep.subr.bf16.mxu0 0
        %2439 = vmatpush2.bf16.xpose.msra.mxu0 0
        %2440 = vmatprep.subr.bf16.mxu0 0
        %2441 = vmatpush2.bf16.xpose.msra.mxu0 0
        %2442 = vmatprep.subr.bf16.mxu0 0
        %2443 = vmatpush2.bf16.xpose.msra.mxu0 0
        %2444 = vmatprep.subr.bf16.mxu0 0
        %2445 = vmatpush2.bf16.xpose.msra.mxu0 0
        %2446 = vmatprep.subr.bf16.mxu0 0
        %2447 = vmatpush2.bf16.xpose.msra.mxu0 0
        %2448 = vmatprep.subr.bf16.mxu0 0
        %2449 = vmatpush2.bf16.xpose.msra.mxu0 0
        %2450 = vmatprep.subr.bf16.mxu0 0
        %2451 = vmatpush2.bf16.xpose.msra.mxu0 0
        %2452 = vmatprep.mubr.bf16.mxu0 0
        %2453 = vmatmul.mubr.bf16.gmra.mxu0 %v2406
        %v2454 = vpop.f32.mrf.mxu0
        %v2455 = vadd.f32 0.0, %v2454
        %v2456 = vpop.f32.mrf.mxu0
        %v2457 = vpop.f32.mrf.mxu0
        %v2458 = vadd.f32 0.0, %v2457
        %v2459 = vpop.f32.mrf.mxu0
        %2460 = vdwg.mxu0
        %v2462 = vsel %vm1444, %v696, 0
        %v2465 = vsel %vm1444, %v2169, 0
        %v2468 = vsel %vm1444, %v2170, 0
        %v2471 = vsel %vm1444, %v2171, 0
        %v2474 = vsel %vm1444, %v2172, 0
        %2476 = vmatprep.subr.bf16.mxu0 0
        %2477 = vmatpush1.bf16.xpose.msra.mxu0 0
        %2478 = vmatprep.subr.bf16.mxu0 0
        %2479 = vmatpush1.bf16.xpose.msra.mxu0 0
        %2480 = vmatprep.subr.bf16.mxu0 0
        %2481 = vmatpush1.bf16.xpose.msra.mxu0 0
        %2482 = vmatprep.subr.bf16.mxu0 0
        %2483 = vmatpush1.bf16.xpose.msra.mxu0 0
        %2484 = vmatprep.subr.bf16.mxu0 0
        %2485 = vmatpush1.bf16.xpose.msra.mxu0 %v2474
        %2486 = vmatprep.subr.bf16.mxu0 0
        %2487 = vmatpush1.bf16.xpose.msra.mxu0 %v2471
        %2488 = vmatprep.subr.bf16.mxu0 0
        %2489 = vmatpush1.bf16.xpose.msra.mxu0 %v2468
        %2490 = vmatprep.subr.bf16.mxu0 0
        %2491 = vmatpush1.bf16.xpose.msra.mxu0 %v2465
        %2492 = vmatprep.subr.bf16.mxu0 0
        %2493 = vmatpush2.bf16.xpose.msra.mxu0 0
        %2494 = vmatprep.subr.bf16.mxu0 0
        %2495 = vmatpush2.bf16.xpose.msra.mxu0 0
        %2496 = vmatprep.subr.bf16.mxu0 0
        %2497 = vmatpush2.bf16.xpose.msra.mxu0 0
        %2498 = vmatprep.subr.bf16.mxu0 0
        %2499 = vmatpush2.bf16.xpose.msra.mxu0 0
        %2500 = vmatprep.subr.bf16.mxu0 0
        %2501 = vmatpush2.bf16.xpose.msra.mxu0 0
        %2502 = vmatprep.subr.bf16.mxu0 0
        %2503 = vmatpush2.bf16.xpose.msra.mxu0 0
        %2504 = vmatprep.subr.bf16.mxu0 0
        %2505 = vmatpush2.bf16.xpose.msra.mxu0 0
        %2506 = vmatprep.subr.bf16.mxu0 0
        %2507 = vmatpush2.bf16.xpose.msra.mxu0 0
        %2508 = vmatprep.mubr.bf16.mxu0 0
        %2509 = vmatmul.mubr.bf16.gmra.mxu0 %v2462
        %v2510 = vpop.f32.mrf.mxu0
        %v2511 = vadd.f32 0.0, %v2510
        %v2512 = vpop.f32.mrf.mxu0
        %v2513 = vpop.f32.mrf.mxu0
        %v2514 = vadd.f32 0.0, %v2513
        %v2515 = vpop.f32.mrf.mxu0
        %2516 = vdwg.mxu0
        %v2518 = vsel %vm1444, %v697, 0
        %v2521 = vsel %vm1444, %v2173, 0
        %v2524 = vsel %vm1444, %v2174, 0
        %v2527 = vsel %vm1444, %v2175, 0
        %v2530 = vsel %vm1444, %v2176, 0
        %2532 = vmatprep.subr.bf16.mxu0 0
        %2533 = vmatpush1.bf16.xpose.msra.mxu0 0
        %2534 = vmatprep.subr.bf16.mxu0 0
        %2535 = vmatpush1.bf16.xpose.msra.mxu0 0
        %2536 = vmatprep.subr.bf16.mxu0 0
        %2537 = vmatpush1.bf16.xpose.msra.mxu0 0
        %2538 = vmatprep.subr.bf16.mxu0 0
        %2539 = vmatpush1.bf16.xpose.msra.mxu0 0
        %2540 = vmatprep.subr.bf16.mxu0 0
        %2541 = vmatpush1.bf16.xpose.msra.mxu0 %v2530
        %2542 = vmatprep.subr.bf16.mxu0 0
        %2543 = vmatpush1.bf16.xpose.msra.mxu0 %v2527
        %2544 = vmatprep.subr.bf16.mxu0 0
        %2545 = vmatpush1.bf16.xpose.msra.mxu0 %v2524
        %2546 = vmatprep.subr.bf16.mxu0 0
        %2547 = vmatpush1.bf16.xpose.msra.mxu0 %v2521
        %2548 = vmatprep.subr.bf16.mxu0 0
        %2549 = vmatpush2.bf16.xpose.msra.mxu0 0
        %2550 = vmatprep.subr.bf16.mxu0 0
        %2551 = vmatpush2.bf16.xpose.msra.mxu0 0
        %2552 = vmatprep.subr.bf16.mxu0 0
        %2553 = vmatpush2.bf16.xpose.msra.mxu0 0
        %2554 = vmatprep.subr.bf16.mxu0 0
        %2555 = vmatpush2.bf16.xpose.msra.mxu0 0
        %2556 = vmatprep.subr.bf16.mxu0 0
        %2557 = vmatpush2.bf16.xpose.msra.mxu0 0
        %2558 = vmatprep.subr.bf16.mxu0 0
        %2559 = vmatpush2.bf16.xpose.msra.mxu0 0
        %2560 = vmatprep.subr.bf16.mxu0 0
        %2561 = vmatpush2.bf16.xpose.msra.mxu0 0
        %2562 = vmatprep.subr.bf16.mxu0 0
        %2563 = vmatpush2.bf16.xpose.msra.mxu0 0
        %2564 = vmatprep.mubr.bf16.mxu0 0
        %2565 = vmatmul.mubr.bf16.gmra.mxu0 %v2518
        %v2566 = vpop.f32.mrf.mxu0
        %v2567 = vadd.f32 0.0, %v2566
        %v2568 = vpop.f32.mrf.mxu0
        %v2569 = vpop.f32.mrf.mxu0
        %v2570 = vadd.f32 0.0, %v2569
        %v2571 = vpop.f32.mrf.mxu0
        %2572 = vdwg.mxu0
        %v2574 = vsel %vm1444, %v698, 0
        %v2577 = vsel %vm1444, %v2177, 0
        %v2580 = vsel %vm1444, %v2178, 0
        %v2583 = vsel %vm1444, %v2179, 0
        %v2586 = vsel %vm1444, %v2180, 0
        %2588 = vmatprep.subr.bf16.mxu0 0
        %2589 = vmatpush1.bf16.xpose.msra.mxu0 0
        %2590 = vmatprep.subr.bf16.mxu0 0
        %2591 = vmatpush1.bf16.xpose.msra.mxu0 0
        %2592 = vmatprep.subr.bf16.mxu0 0
        %2593 = vmatpush1.bf16.xpose.msra.mxu0 0
        %2594 = vmatprep.subr.bf16.mxu0 0
        %2595 = vmatpush1.bf16.xpose.msra.mxu0 0
        %2596 = vmatprep.subr.bf16.mxu0 0
        %2597 = vmatpush1.bf16.xpose.msra.mxu0 %v2586
        %2598 = vmatprep.subr.bf16.mxu0 0
        %2599 = vmatpush1.bf16.xpose.msra.mxu0 %v2583
        %2600 = vmatprep.subr.bf16.mxu0 0
        %2601 = vmatpush1.bf16.xpose.msra.mxu0 %v2580
        %2602 = vmatprep.subr.bf16.mxu0 0
        %2603 = vmatpush1.bf16.xpose.msra.mxu0 %v2577
        %2604 = vmatprep.subr.bf16.mxu0 0
        %2605 = vmatpush2.bf16.xpose.msra.mxu0 0
        %2606 = vmatprep.subr.bf16.mxu0 0
        %2607 = vmatpush2.bf16.xpose.msra.mxu0 0
        %2608 = vmatprep.subr.bf16.mxu0 0
        %2609 = vmatpush2.bf16.xpose.msra.mxu0 0
        %2610 = vmatprep.subr.bf16.mxu0 0
        %2611 = vmatpush2.bf16.xpose.msra.mxu0 0
        %2612 = vmatprep.subr.bf16.mxu0 0
        %2613 = vmatpush2.bf16.xpose.msra.mxu0 0
        %2614 = vmatprep.subr.bf16.mxu0 0
        %2615 = vmatpush2.bf16.xpose.msra.mxu0 0
        %2616 = vmatprep.subr.bf16.mxu0 0
        %2617 = vmatpush2.bf16.xpose.msra.mxu0 0
        %2618 = vmatprep.subr.bf16.mxu0 0
        %2619 = vmatpush2.bf16.xpose.msra.mxu0 0
        %2620 = vmatprep.mubr.bf16.mxu0 0
        %2621 = vmatmul.mubr.bf16.gmra.mxu0 %v2574
        %v2622 = vpop.f32.mrf.mxu0
        %v2623 = vadd.f32 0.0, %v2622
        %v2624 = vpop.f32.mrf.mxu0
        %v2625 = vpop.f32.mrf.mxu0
        %v2626 = vadd.f32 0.0, %v2625
        %v2627 = vpop.f32.mrf.mxu0
        %2628 = vdwg.mxu0
        %v2629 = vpack.c.bf16 %v2234, %v2231
        %v2630 = vpack.c.bf16 %v2290, %v2287
        %v2631 = vpack.c.bf16 %v2346, %v2343
        %v2632 = vpack.c.bf16 %v2402, %v2399
        %v2633 = vpack.c.bf16 %v2458, %v2455
        %v2634 = vpack.c.bf16 %v2514, %v2511
        %v2635 = vpack.c.bf16 %v2570, %v2567
        %v2636 = vpack.c.bf16 %v2626, %v2623
        %v2637 = vld [vmem:[#allocation7] sm:$0xf]
        %v2638 = vld [vmem:[#allocation7 + $0x4] sm:$0xf]
        %v2639 = vld [vmem:[#allocation7 + $0x8] sm:$0xf]
        %v2640 = vld [vmem:[#allocation7 + $0xc] sm:$0xf]
        %v2641 = vld [vmem:[#allocation7 + $0x10] sm:$0xf]
        %v2642 = vld [vmem:[#allocation7 + $0x14] sm:$0xf]
        %v2643 = vld [vmem:[#allocation7 + $0x18] sm:$0xf]
        %v2644 = vld [vmem:[#allocation7 + $0x1c] sm:$0xf]
        %v2645 = vld [vmem:[#allocation7 + $0x20] sm:$0xf]
        %v2646 = vld [vmem:[#allocation7 + $0x24] sm:$0xf]
        %v2647 = vld [vmem:[#allocation7 + $0x28] sm:$0xf]
        %v2648 = vld [vmem:[#allocation7 + $0x2c] sm:$0xf]
        %v2649 = vld [vmem:[#allocation7 + $0x30] sm:$0xf]
        %v2650 = vld [vmem:[#allocation7 + $0x34] sm:$0xf]
        %v2651 = vld [vmem:[#allocation7 + $0x38] sm:$0xf]
        %v2652 = vld [vmem:[#allocation7 + $0x3c] sm:$0xf]
        %v2653 = vld [vmem:[%s3] sm:$0x1]
        %v2655 = vlaneseq
        %v2656 = vshrl.u32 %v2655, 7
        %v2657 = vsub.s32 0, %v2656
        %v2658 = vrot.slane %v2653, %v2657
        %2660 = vxpose.xlu0.c.b16.start [1/8] %v2629, 128
        %2661 = vxpose.xlu0.c.b16.cont [2/8] %v2630, 128
        %2662 = vxpose.xlu0.c.b16.cont [3/8] %v2631, 128
        %2663 = vxpose.xlu0.c.b16.cont [4/8] %v2632, 128
        %2664 = vxpose.xlu0.c.b16.cont [5/8] %v2633, 128
        %2665 = vxpose.xlu0.c.b16.cont [6/8] %v2634, 128
        %2666 = vxpose.xlu0.c.b16.cont [7/8] %v2635, 128
        %2667 = vxpose.xlu0.c.b16.end [8/8] %v2636, 128
        %v2668 = vpop.trf.xlu0
        %v2669 = vpop.trf.xlu0
        %v2670 = vpop.trf.xlu0
        %v2671 = vpop.trf.xlu0
        %v2672 = vpop.trf.xlu0
        %v2673 = vpop.trf.xlu0
        %v2674 = vpop.trf.xlu0
        %v2675 = vpop.trf.xlu0
        %v2692 = vunpack.c.l.b16 %v2637
        %v2693 = vunpack.c.l.b16 %v2638
        %v2694 = vunpack.c.l.b16 %v2639
        %v2695 = vunpack.c.l.b16 %v2640
        %v2696 = vunpack.c.l.b16 %v2641
        %v2697 = vunpack.c.l.b16 %v2642
        %v2698 = vunpack.c.l.b16 %v2643
        %v2699 = vunpack.c.l.b16 %v2644
        %v2700 = vunpack.c.l.b16 %v2645
        %v2701 = vunpack.c.l.b16 %v2646
        %v2702 = vunpack.c.l.b16 %v2647
        %v2703 = vunpack.c.l.b16 %v2648
        %v2704 = vunpack.c.l.b16 %v2649
        %v2705 = vunpack.c.l.b16 %v2650
        %v2706 = vunpack.c.l.b16 %v2651
        %v2707 = vunpack.c.l.b16 %v2652
        %v2708 = vpack.c.b16 %v2693, %v2692
        %v2709 = vpack.c.b16 %v2695, %v2694
        %v2710 = vpack.c.b16 %v2697, %v2696
        %v2711 = vpack.c.b16 %v2699, %v2698
        %v2712 = vpack.c.b16 %v2701, %v2700
        %v2713 = vpack.c.b16 %v2703, %v2702
        %v2714 = vpack.c.b16 %v2705, %v2704
        %v2715 = vpack.c.b16 %v2707, %v2706
        %2724 = vmatprep.subr.bf16.mxu0 0
        %2725 = vmatpush1.bf16.msra.mxu0 %v2715
        %2726 = vmatprep.subr.bf16.mxu0 0
        %2727 = vmatpush1.bf16.msra.mxu0 %v2714
        %2728 = vmatprep.subr.bf16.mxu0 0
        %2729 = vmatpush1.bf16.msra.mxu0 %v2713
        %2730 = vmatprep.subr.bf16.mxu0 0
        %2731 = vmatpush1.bf16.msra.mxu0 %v2712
        %2732 = vmatprep.subr.bf16.mxu0 0
        %2733 = vmatpush1.bf16.msra.mxu0 %v2711
        %2734 = vmatprep.subr.bf16.mxu0 0
        %2735 = vmatpush1.bf16.msra.mxu0 %v2710
        %2736 = vmatprep.subr.bf16.mxu0 0
        %2737 = vmatpush1.bf16.msra.mxu0 %v2709
        %2738 = vmatprep.subr.bf16.mxu0 0
        %2739 = vmatpush1.bf16.msra.mxu0 %v2708
        %2740 = vmatprep.subr.bf16.mxu0 0
        %2741 = vmatpush2.bf16.msra.mxu0 0
        %2742 = vmatprep.subr.bf16.mxu0 0
        %2743 = vmatpush2.bf16.msra.mxu0 0
        %2744 = vmatprep.subr.bf16.mxu0 0
        %2745 = vmatpush2.bf16.msra.mxu0 0
        %2746 = vmatprep.subr.bf16.mxu0 0
        %2747 = vmatpush2.bf16.msra.mxu0 0
        %2748 = vmatprep.subr.bf16.mxu0 0
        %2749 = vmatpush2.bf16.msra.mxu0 0
        %2750 = vmatprep.subr.bf16.mxu0 0
        %2751 = vmatpush2.bf16.msra.mxu0 0
        %2752 = vmatprep.subr.bf16.mxu0 0
        %2753 = vmatpush2.bf16.msra.mxu0 0
        %2754 = vmatprep.subr.bf16.mxu0 0
        %2755 = vmatpush2.bf16.msra.mxu0 0
        %2756 = vmatprep.mubr.bf16.mxu0 0
        %2757 = vmatmul.mubr.bf16.gmra.mxu0 %v2668
        %v2758 = vpop.f32.mrf.mxu0
        %v2759 = vadd.f32 %v2658, %v2758
        %v2760 = vpop.f32.mrf.mxu0
        %v2761 = vpop.f32.mrf.mxu0
        %v2762 = vadd.f32 %v2658, %v2761
        %v2763 = vpop.f32.mrf.mxu0
        %2764 = vmatprep.mubr.bf16.mxu0 0
        %2765 = vmatmul.mubr.bf16.gmra.mxu0 %v2669
        %v2766 = vpop.f32.mrf.mxu0
        %v2767 = vadd.f32 %v2658, %v2766
        %v2768 = vpop.f32.mrf.mxu0
        %v2769 = vpop.f32.mrf.mxu0
        %v2770 = vadd.f32 %v2658, %v2769
        %v2771 = vpop.f32.mrf.mxu0
        %2772 = vmatprep.mubr.bf16.mxu0 0
        %2773 = vmatmul.mubr.bf16.gmra.mxu0 %v2670
        %v2774 = vpop.f32.mrf.mxu0
        %v2775 = vadd.f32 %v2658, %v2774
        %v2776 = vpop.f32.mrf.mxu0
        %v2777 = vpop.f32.mrf.mxu0
        %v2778 = vadd.f32 %v2658, %v2777
        %v2779 = vpop.f32.mrf.mxu0
        %2780 = vmatprep.mubr.bf16.mxu0 0
        %2781 = vmatmul.mubr.bf16.gmra.mxu0 %v2671
        %v2782 = vpop.f32.mrf.mxu0
        %v2783 = vadd.f32 %v2658, %v2782
        %v2784 = vpop.f32.mrf.mxu0
        %v2785 = vpop.f32.mrf.mxu0
        %v2786 = vadd.f32 %v2658, %v2785
        %v2787 = vpop.f32.mrf.mxu0
        %2788 = vdwg.mxu0
        %2789 = vst [vmem:[%s244] sm:$0xff] %v2759
        %2790 = vst [vmem:[%s244 + $0x8] sm:$0xff] %v2762
        %2791 = vst [vmem:[%s244 + $0x10] sm:$0xff] %v2767
        %2792 = vst [vmem:[%s244 + $0x18] sm:$0xff] %v2770
        %2793 = vst [vmem:[%s244 + $0x20] sm:$0xff] %v2775
        %2794 = vst [vmem:[%s244 + $0x28] sm:$0xff] %v2778
        %2795 = vst [vmem:[%s244 + $0x30] sm:$0xff] %v2783
        %2796 = vst [vmem:[%s244 + $0x38] sm:$0xff] %v2786
        %s2797 = sand.u32 %s119, 1
        %s2798 = scalar_lea.sflag [#allocation4], %s2797
        %s2799 = sand.u32 %s119, 1
        %s2800 = smul.addr %s2799, 64
        %s2801 = scalar_lea.vmem [#allocation8], %s2800
        // Predicated region
        $region49: #{tpu_custom_call.1} parent=35 // pred_check
          %p2802 = pneg %p129
        $region50: #{tpu_custom_call.1} parent=35 // pred_check_branch
          %2804 = sbr.rel (%p2802) target = $region52
        $region51: #{tpu_custom_call.1} parent=35 // pred_region
          %s2806 = ssub.s32 1024, 1024
          %2807 = vsyncadd %s2798, %s2806
          %s2808 = smul.addr %s22, 8
          %s2809 = smul.addr %s2808, 128
          %s2810 = scalar_lea.hbm %s4, %s2809
          %s2811 = sshll.u32 %s2801, 4
          %s2812 = int_to_ptr.vmem [resolvable:$true] %s2811
          %2817 = dma.vmem_to_hbm [thread:$0]  %s2812, 1024, %s2810, %s2798, 128, 128, 8
        $region52: #{tpu_custom_call.1} parent=35 // pred_fallthru
          _
      $region36: #{tpu_custom_call.1} parent=5 // pred_fallthru
        _
      %p2818 = scmp.le.s32.totalorder 2, %s17
      // Predicated region
      $region53: #{tpu_custom_call.1} parent=5 // pred_check
        %p2819 = pneg %p2818
      $region54: #{tpu_custom_call.1} parent=5 // pred_check_branch
        %2821 = sbr.rel (%p2819) target = $region56
      $region55: #{tpu_custom_call.1} parent=5 // pred_region
        %s2822 = ssub.s32 %s17, 2
        // Predicated region
        $region57: #{tpu_custom_call.1} parent=55 // pred_check
          %p2823 = pneg %p135
        $region58: #{tpu_custom_call.1} parent=55 // pred_check_branch
          %2825 = sbr.rel (%p2823) target = $region60
        $region59: #{tpu_custom_call.1} parent=55 // pred_region
          %s2826 = sand.u32 %s120, 1
          %s2827 = scalar_lea.sflag [#allocation4], %s2826
          %s2828 = sand.u32 %s120, 1
          %s2829 = smul.addr %s2828, 64
          %s2830 = scalar_lea.vmem [#allocation8], %s2829
          %2831 = dma.done %s2827, 1024
        $region60: #{tpu_custom_call.1} parent=55 // pred_fallthru
          _
      $region56: #{tpu_custom_call.1} parent=5 // pred_fallthru
        _
    $region6: #{tpu_custom_call.1} parent=1 // loop_footer
      %s21 = sadd.s32 1, %s17
    $region7: #{tpu_custom_call.1} parent=1 // loop_footer_branch
      %16 = sbr.rel target = $region3
    $region8: #{tpu_custom_call.1} parent=1 // loop_exit
      _
    %2832 = vsyncpa [#allocation3], 1
    %s2833 = scalar_lea.sflag [#allocation3], 1
    %2834 = vsyncpa %s2833, 1
    %2835 = vsyncpa [#allocation6], 1
    %2836 = vsyncpa [#allocation4], 1
    %s2837 = scalar_lea.sflag [#allocation4], 1
    %2838 = vsyncpa %s2837, 1

</llo_original>
